<compile_context>
chip_gen: v6e
topology: v6e:2x2x1
jax: 0.10.0
libtpu: 0.0.40
codegen_flags: <defaults>
</compile_context>

<pallas_src>
import jax
import jax.numpy as jnp
from jax.experimental import pallas as pl
from jax.experimental.pallas import tpu as pltpu

_LANE = 128
_SUBLANE = 8


def _round_up(x, m):
    return (x + m - 1) // m * m


# ----------------------------------------------------------------------------
# Fused decoder-step kernel
# ----------------------------------------------------------------------------
def _make_decoder_kernel(n_layers, h_pad):
    """Build the fused kernel for a fixed layer count / padded hidden width."""

    def kernel(trg_ref,        # SMEM  [B_pad] int32  (scalar prefetch)
               emb_ref,        # HBM   [V, E_pad] f32 (memory_space=ANY)
               h_in_ref,       # VMEM  [L, B_pad, H_pad] f32
               c_in_ref,       # VMEM  [L, B_pad, H_pad] f32
               *rest):
        # rest = W_0..W_{L-1}, b_0..b_{L-1}, w_out, b_out,
        #        pred, h_out, c_out, x_gather, x_last, gather_sem
        w_refs = rest[0:n_layers]                     # [(K_pad+H_pad), 4H_pad] bf16
        b_refs = rest[n_layers:2 * n_layers]          # [1, 4H_pad] f32
        w_out_ref = rest[2 * n_layers]                # [H_pad, TN] bf16
        b_out_ref = rest[2 * n_layers + 1]            # [1, TN] f32
        pred_ref = rest[2 * n_layers + 2]             # [B_pad, TN] f32
        h_out_ref = rest[2 * n_layers + 3]            # [L, B_pad, H_pad] f32
        c_out_ref = rest[2 * n_layers + 4]            # [L, B_pad, H_pad] f32
        x_gather = rest[2 * n_layers + 5]             # VMEM [B_pad, E_pad] f32
        x_last = rest[2 * n_layers + 6]               # VMEM [B_pad, H_pad] bf16
        gsem = rest[2 * n_layers + 7]                 # DMA sems [B_pad]

        j = pl.program_id(0)                          # vocab-tile index

        # LSTM stack + embedding gather: done once, result kept in VMEM scratch.
        @pl.when(j == 0)
        def _lstm_step():
            bsz = x_gather.shape[0]
            copies = []
            for b in range(bsz):
                cp = pltpu.make_async_copy(emb_ref.at[trg_ref[b]],
                                           x_gather.at[b],
                                           gsem.at[b])
                cp.start()
                copies.append(cp)
            for cp in copies:
                cp.wait()

            x = x_gather[...].astype(jnp.bfloat16)    # [B, E_pad]
            for layer in range(n_layers):
                h_prev = h_in_ref[layer]              # [B, H_pad] f32
                c_prev = c_in_ref[layer]              # [B, H_pad] f32
                xh = jnp.concatenate(
                    [x, h_prev.astype(jnp.bfloat16)], axis=-1)
                gates = (jnp.dot(xh, w_refs[layer][...],
                                 preferred_element_type=jnp.float32)
                         + b_refs[layer][...])        # [B, 4*H_pad] f32
                i_g = jax.nn.sigmoid(gates[:, 0 * h_pad:1 * h_pad])
                f_g = jax.nn.sigmoid(gates[:, 1 * h_pad:2 * h_pad])
                g_g = jnp.tanh(gates[:, 2 * h_pad:3 * h_pad])
                o_g = jax.nn.sigmoid(gates[:, 3 * h_pad:4 * h_pad])
                c_new = f_g * c_prev + i_g * g_g
                h_new = o_g * jnp.tanh(c_new)
                h_out_ref[layer] = h_new
                c_out_ref[layer] = c_new
                # inter-layer dropout: identity (eval mode)
                x = h_new.astype(jnp.bfloat16)
            x_last[...] = x

        # Vocab projection for this tile (runs for every grid step j).
        pred_ref[...] = (jnp.dot(x_last[...], w_out_ref[...],
                                 preferred_element_type=jnp.float32)
                         + b_out_ref[...])

    return kernel


# ----------------------------------------------------------------------------
# Parameter preparation (PyTorch layout -> padded / merged / bf16 kernel layout)
# ----------------------------------------------------------------------------
def prep_kernel_params(tp, emb_dim, hid_dim, output_dim):
    n_layers = len(tp["w_ih"])
    e_pad = _round_up(emb_dim, _LANE)
    h_pad = _round_up(hid_dim, _LANE)
    v_pad = _round_up(output_dim, _LANE)

    # Embedding kept f32 (gather traffic is tiny); columns padded with zeros.
    emb = jnp.zeros((output_dim, e_pad), jnp.float32)
    emb = emb.at[:, :emb_dim].set(tp["embedding"])

    w_merged, b_merged = [], []
    for layer in range(n_layers):
        in_dim = emb_dim if layer == 0 else hid_dim
        in_pad = e_pad if layer == 0 else h_pad
        w = jnp.zeros((in_pad + h_pad, 4 * h_pad), jnp.float32)
        bias = jnp.zeros((1, 4 * h_pad), jnp.float32)
        w_ih_t = tp["w_ih"][layer].T          # [in_dim, 4*hid]
        w_hh_t = tp["w_hh"][layer].T          # [hid, 4*hid]
        b_sum = tp["b_ih"][layer] + tp["b_hh"][layer]
        for g in range(4):                    # gate order i, f, g, o
            w = w.at[:in_dim, g * h_pad:g * h_pad + hid_dim].set(
                w_ih_t[:, g * hid_dim:(g + 1) * hid_dim])
            w = w.at[in_pad:in_pad + hid_dim, g * h_pad:g * h_pad + hid_dim].set(
                w_hh_t[:, g * hid_dim:(g + 1) * hid_dim])
            bias = bias.at[0, g * h_pad:g * h_pad + hid_dim].set(
                b_sum[g * hid_dim:(g + 1) * hid_dim])
        w_merged.append(w.astype(jnp.bfloat16))
        b_merged.append(bias)

    w_out = jnp.zeros((h_pad, v_pad), jnp.float32)
    w_out = w_out.at[:hid_dim, :output_dim].set(tp["w_out"].T)
    b_out = jnp.zeros((1, v_pad), jnp.float32)
    b_out = b_out.at[0, :output_dim].set(tp["b_out"])

    return {
        "embedding": emb,
        "w_merged": w_merged,
        "b_merged": b_merged,
        "w_out": w_out.astype(jnp.bfloat16),
        "b_out": b_out,
        "dims": {"emb_dim": emb_dim, "hid_dim": hid_dim,
                 "output_dim": output_dim, "E_pad": e_pad,
                 "H_pad": h_pad, "V_pad": v_pad, "n_layers": n_layers},
    }


# ----------------------------------------------------------------------------
# Decoder forward (one fused pallas_call)
# ----------------------------------------------------------------------------
def decoder_forward(kp, trg, hidden, cell):
    d = kp["dims"]
    n_layers = d["n_layers"]
    e_pad, h_pad, v_pad = d["E_pad"], d["H_pad"], d["V_pad"]
    hid_dim, output_dim = d["hid_dim"], d["output_dim"]

    batch = trg.shape[0]
    b_pad = _round_up(batch, _SUBLANE)

    trg_p = jnp.zeros((b_pad,), jnp.int32).at[:batch].set(trg.astype(jnp.int32))
    h_p = jnp.zeros((n_layers, b_pad, h_pad), jnp.float32)
    h_p = h_p.at[:, :batch, :hid_dim].set(hidden)
    c_p = jnp.zeros((n_layers, b_pad, h_pad), jnp.float32)
    c_p = c_p.at[:, :batch, :hid_dim].set(cell)

    # Vocab tile width: largest of {512, 256, 128} that divides V_pad.
    tn = 512
    while v_pad % tn:
        tn //= 2
    nv = v_pad // tn

    kernel = _make_decoder_kernel(n_layers, h_pad)

    const3 = lambda j, trg_ref: (0, 0, 0)
    const2 = lambda j, trg_ref: (0, 0)

    in_specs = [
        pl.BlockSpec(memory_space=pl.ANY),                         # embedding (HBM)
        pl.BlockSpec((n_layers, b_pad, h_pad), const3),            # h_in
        pl.BlockSpec((n_layers, b_pad, h_pad), const3),            # c_in
    ]
    in_specs += [pl.BlockSpec(w.shape, const2) for w in kp["w_merged"]]
    in_specs += [pl.BlockSpec(b.shape, const2) for b in kp["b_merged"]]
    in_specs += [
        pl.BlockSpec((h_pad, tn), lambda j, trg_ref: (0, j)),      # w_out tile
        pl.BlockSpec((1, tn), lambda j, trg_ref: (0, j)),          # b_out tile
    ]

    out_specs = [
        pl.BlockSpec((b_pad, tn), lambda j, trg_ref: (0, j)),      # prediction tile
        pl.BlockSpec((n_layers, b_pad, h_pad), const3),            # h_out
        pl.BlockSpec((n_layers, b_pad, h_pad), const3),            # c_out
    ]

    grid_spec = pltpu.PrefetchScalarGridSpec(
        num_scalar_prefetch=1,
        grid=(nv,),
        in_specs=in_specs,
        out_specs=out_specs,
        scratch_shapes=[
            pltpu.VMEM((b_pad, e_pad), jnp.float32),     # gathered embeddings
            pltpu.VMEM((b_pad, h_pad), jnp.bfloat16),    # last layer output
            pltpu.SemaphoreType.DMA((b_pad,)),           # gather semaphores
        ],
    )

    pred_p, h_new_p, c_new_p = pl.pallas_call(
        kernel,
        grid_spec=grid_spec,
        out_shape=(
            jax.ShapeDtypeStruct((b_pad, v_pad), jnp.float32),
            jax.ShapeDtypeStruct((n_layers, b_pad, h_pad), jnp.float32),
            jax.ShapeDtypeStruct((n_layers, b_pad, h_pad), jnp.float32),
        ),
        compiler_params=pltpu.CompilerParams(
            dimension_semantics=("arbitrary",)),
    )(trg_p, kp["embedding"], h_p, c_p,
      *kp["w_merged"], *kp["b_merged"], kp["w_out"], kp["b_out"])

    return (pred_p[:batch, :output_dim],
            h_new_p[:, :batch, :hid_dim],
            c_new_p[:, :batch, :hid_dim])


# ----------------------------------------------------------------------------
# Pure-JAX reference (true f32 PyTorch semantics) for correctness check
# ----------------------------------------------------------------------------
def decoder_forward_ref(tp, trg, hidden, cell):
    x = jnp.take(tp["embedding"], trg, axis=0)
    hid = hidden.shape[-1]
    new_h, new_c = [], []
    for layer in range(len(tp["w_ih"])):
        gates = (x @ tp["w_ih"][layer].T + hidden[layer] @ tp["w_hh"][layer].T
                 + tp["b_ih"][layer] + tp["b_hh"][layer])
        i_g = jax.nn.sigmoid(gates[:, 0 * hid:1 * hid])
        f_g = jax.nn.sigmoid(gates[:, 1 * hid:2 * hid])
        g_g = jnp.tanh(gates[:, 2 * hid:3 * hid])
        o_g = jax.nn.sigmoid(gates[:, 3 * hid:4 * hid])
        c_new = f_g * cell[layer] + i_g * g_g
        h_new = o_g * jnp.tanh(c_new)
        new_h.append(h_new)
        new_c.append(c_new)
        x = h_new
    pred = x @ tp["w_out"].T + tp["b_out"]
    return pred, jnp.stack(new_h), jnp.stack(new_c)


# ----------------------------------------------------------------------------
# Deterministic "PyTorch layout" parameter init
# ----------------------------------------------------------------------------
def init_torch_params(key, output_dim, emb_dim, hid_dim, n_layers):
    keys = jax.random.split(key, 3 + 4 * n_layers)
    kstd = 1.0 / (hid_dim ** 0.5)
    tp = {
        "embedding": jax.random.normal(keys[0], (output_dim, emb_dim),
                                       jnp.float32),
        "w_out": jax.random.uniform(keys[1], (output_dim, hid_dim),
                                    jnp.float32, -kstd, kstd),
        "b_out": jax.random.uniform(keys[2], (output_dim,),
                                    jnp.float32, -kstd, kstd),
        "w_ih": [], "w_hh": [], "b_ih": [], "b_hh": [],
    }
    for layer in range(n_layers):
        in_dim = emb_dim if layer == 0 else hid_dim
        k4 = keys[3 + 4 * layer: 7 + 4 * layer]
        tp["w_ih"].append(jax.random.uniform(
            k4[0], (4 * hid_dim, in_dim), jnp.float32, -kstd, kstd))
        tp["w_hh"].append(jax.random.uniform(
            k4[1], (4 * hid_dim, hid_dim), jnp.float32, -kstd, kstd))
        tp["b_ih"].append(jax.random.uniform(
            k4[2], (4 * hid_dim,), jnp.float32, -kstd, kstd))
        tp["b_hh"].append(jax.random.uniform(
            k4[3], (4 * hid_dim,), jnp.float32, -kstd, kstd))
    return tp


if __name__ == "__main__":
    output_dim = 50     # vocab size
    emb_dim = 24
    hid_dim = 32
    n_layers = 2
    batch = 8

    key = jax.random.PRNGKey(0)
    pkey, tkey, hkey, ckey = jax.random.split(key, 4)

    torch_params = init_torch_params(pkey, output_dim, emb_dim, hid_dim,
                                     n_layers)
    kparams = prep_kernel_params(torch_params, emb_dim, hid_dim, output_dim)

    trg = jax.random.randint(tkey, (batch,), 0, output_dim, jnp.int32)
    hidden = jax.random.normal(hkey, (n_layers, batch, hid_dim), jnp.float32)
    cell = jax.random.normal(ckey, (n_layers, batch, hid_dim), jnp.float32)

    pred, h_new, c_new = decoder_forward(kparams, trg, hidden, cell)
    jax.block_until_ready((pred, h_new, c_new))

    pred_r, h_r, c_r = decoder_forward_ref(torch_params, trg, hidden, cell)

    assert pred.shape == (batch, output_dim)
    assert h_new.shape == (n_layers, batch, hid_dim)
    assert c_new.shape == (n_layers, batch, hid_dim)
    # Tolerance accounts for bf16 weight/activation storage in the kernel
    # (reference runs full f32); real bugs (gate order, index errors, padding
    # leakage) produce O(0.1 - 1) errors, far above this threshold.
    assert jnp.allclose(pred, pred_r, atol=2e-2, rtol=2e-2)
    assert jnp.allclose(h_new, h_r, atol=2e-2, rtol=2e-2)
    assert jnp.allclose(c_new, c_r, atol=2e-2, rtol=2e-2)

    print("KERNEL_OK")
</pallas_src>

<mosaic_0001>
module attributes {stable_mosaic.version = 11 : i64} {
  func.func @kernel(%arg0: i32, %arg1: memref<8xi32, #tpu.memory_space<smem>>, %arg2: memref<50x128xf32, #tpu.memory_space<any>>, %arg3: memref<2x8x128xf32, #tpu.memory_space<vmem>>, %arg4: memref<2x8x128xf32, #tpu.memory_space<vmem>>, %arg5: memref<256x512xbf16, #tpu.memory_space<vmem>>, %arg6: memref<256x512xbf16, #tpu.memory_space<vmem>>, %arg7: memref<1x512xf32, #tpu.memory_space<vmem>>, %arg8: memref<1x512xf32, #tpu.memory_space<vmem>>, %arg9: memref<128x128xbf16, #tpu.memory_space<vmem>>, %arg10: memref<1x128xf32, #tpu.memory_space<vmem>>, %arg11: memref<8x128xf32, #tpu.memory_space<vmem>>, %arg12: memref<2x8x128xf32, #tpu.memory_space<vmem>>, %arg13: memref<2x8x128xf32, #tpu.memory_space<vmem>>, %arg14: memref<8x128xf32, #tpu.memory_space<vmem>>, %arg15: memref<8x128xbf16, #tpu.memory_space<vmem>>, %arg16: memref<8x!tpu.dma_semaphore, #tpu.memory_space<semaphore_mem>>) attributes {dimension_semantics = [#tpu.dimension_semantics<arbitrary>], iteration_bounds = array<i64: 1>, scalar_prefetch = 1 : i64, scratch_operands = 3 : i64, tpu.core_type = #tpu.core_type<tc>, window_params = [{}, {pipeline_mode = #tpu.pipeline_mode<synchronous>, transform_indices = @transform_1, window_bounds = array<i64: 2, 8, 128>}, {pipeline_mode = #tpu.pipeline_mode<synchronous>, transform_indices = @transform_2, window_bounds = array<i64: 2, 8, 128>}, {pipeline_mode = #tpu.pipeline_mode<synchronous>, transform_indices = @transform_3, window_bounds = array<i64: 256, 512>}, {pipeline_mode = #tpu.pipeline_mode<synchronous>, transform_indices = @transform_4, window_bounds = array<i64: 256, 512>}, {pipeline_mode = #tpu.pipeline_mode<synchronous>, transform_indices = @transform_5, window_bounds = array<i64: 1, 512>}, {pipeline_mode = #tpu.pipeline_mode<synchronous>, transform_indices = @transform_6, window_bounds = array<i64: 1, 512>}, {transform_indices = @transform_7, window_bounds = array<i64: 128, 128>}, {transform_indices = @transform_8, window_bounds = array<i64: 1, 128>}, {transform_indices = @transform_9, window_bounds = array<i64: 8, 128>}, {pipeline_mode = #tpu.pipeline_mode<synchronous>, transform_indices = @transform_10, window_bounds = array<i64: 2, 8, 128>}, {pipeline_mode = #tpu.pipeline_mode<synchronous>, transform_indices = @transform_11, window_bounds = array<i64: 2, 8, 128>}]} {
    %c0_i32 = arith.constant 0 : i32
    %0 = arith.cmpi eq, %arg0, %c0_i32 : i32
    %1 = arith.extui %0 : i1 to i32
    %c0_i32_0 = arith.constant 0 : i32
    %2 = arith.cmpi ne, %1, %c0_i32_0 : i32
    scf.if %2 {
      %c0_8 = arith.constant 0 : index
      %10 = memref.load %arg1[%c0_8] : memref<8xi32, #tpu.memory_space<smem>>
      %c0_i32_9 = arith.constant 0 : i32
      %c0_i32_10 = arith.constant 0 : i32
      %c0_i32_11 = arith.constant 0 : i32
      %11 = tpu.memref_slice %arg2[%10, %c0_i32_11] : memref<50x128xf32, #tpu.memory_space<any>> -> memref<1x128xf32, #tpu.memory_space<any>>
      %12 = tpu.memref_squeeze %11 : memref<1x128xf32, #tpu.memory_space<any>> -> memref<128xf32, #tpu.memory_space<any>>
      %c0_i32_12 = arith.constant 0 : i32
      %13 = tpu.memref_slice %arg14[%c0_i32_9, %c0_i32_12] : memref<8x128xf32, #tpu.memory_space<vmem>> -> memref<1x128xf32, #tpu.memory_space<vmem>>
      %14 = tpu.memref_squeeze %13 : memref<1x128xf32, #tpu.memory_space<vmem>> -> memref<128xf32, #tpu.memory_space<vmem>>
      %15 = tpu.memref_slice %arg16[%c0_i32_10] : memref<8x!tpu.dma_semaphore, #tpu.memory_space<semaphore_mem>> -> memref<1x!tpu.dma_semaphore, #tpu.memory_space<semaphore_mem>>
      %16 = tpu.memref_squeeze %15 : memref<1x!tpu.dma_semaphore, #tpu.memory_space<semaphore_mem>> -> memref<!tpu.dma_semaphore, #tpu.memory_space<semaphore_mem>>
      tpu.enqueue_dma source(%12 : memref<128xf32, #tpu.memory_space<any>>) target(%14 : memref<128xf32, #tpu.memory_space<vmem>>) target_semaphore(%16 : memref<!tpu.dma_semaphore, #tpu.memory_space<semaphore_mem>>)
      %c1 = arith.constant 1 : index
      %17 = memref.load %arg1[%c1] : memref<8xi32, #tpu.memory_space<smem>>
      %c1_i32 = arith.constant 1 : i32
      %c1_i32_13 = arith.constant 1 : i32
      %c0_i32_14 = arith.constant 0 : i32
      %18 = tpu.memref_slice %arg2[%17, %c0_i32_14] : memref<50x128xf32, #tpu.memory_space<any>> -> memref<1x128xf32, #tpu.memory_space<any>>
      %19 = tpu.memref_squeeze %18 : memref<1x128xf32, #tpu.memory_space<any>> -> memref<128xf32, #tpu.memory_space<any>>
      %c0_i32_15 = arith.constant 0 : i32
      %20 = tpu.memref_slice %arg14[%c1_i32, %c0_i32_15] : memref<8x128xf32, #tpu.memory_space<vmem>> -> memref<1x128xf32, #tpu.memory_space<vmem>>
      %21 = tpu.memref_squeeze %20 : memref<1x128xf32, #tpu.memory_space<vmem>> -> memref<128xf32, #tpu.memory_space<vmem>>
      %22 = tpu.memref_slice %arg16[%c1_i32_13] : memref<8x!tpu.dma_semaphore, #tpu.memory_space<semaphore_mem>> -> memref<1x!tpu.dma_semaphore, #tpu.memory_space<semaphore_mem>>
      %23 = tpu.memref_squeeze %22 : memref<1x!tpu.dma_semaphore, #tpu.memory_space<semaphore_mem>> -> memref<!tpu.dma_semaphore, #tpu.memory_space<semaphore_mem>>
      tpu.enqueue_dma source(%19 : memref<128xf32, #tpu.memory_space<any>>) target(%21 : memref<128xf32, #tpu.memory_space<vmem>>) target_semaphore(%23 : memref<!tpu.dma_semaphore, #tpu.memory_space<semaphore_mem>>)
      %c2 = arith.constant 2 : index
      %24 = memref.load %arg1[%c2] : memref<8xi32, #tpu.memory_space<smem>>
      %c2_i32 = arith.constant 2 : i32
      %c2_i32_16 = arith.constant 2 : i32
      %c0_i32_17 = arith.constant 0 : i32
      %25 = tpu.memref_slice %arg2[%24, %c0_i32_17] : memref<50x128xf32, #tpu.memory_space<any>> -> memref<1x128xf32, #tpu.memory_space<any>>
      %26 = tpu.memref_squeeze %25 : memref<1x128xf32, #tpu.memory_space<any>> -> memref<128xf32, #tpu.memory_space<any>>
      %c0_i32_18 = arith.constant 0 : i32
      %27 = tpu.memref_slice %arg14[%c2_i32, %c0_i32_18] : memref<8x128xf32, #tpu.memory_space<vmem>> -> memref<1x128xf32, #tpu.memory_space<vmem>>
      %28 = tpu.memref_squeeze %27 : memref<1x128xf32, #tpu.memory_space<vmem>> -> memref<128xf32, #tpu.memory_space<vmem>>
      %29 = tpu.memref_slice %arg16[%c2_i32_16] : memref<8x!tpu.dma_semaphore, #tpu.memory_space<semaphore_mem>> -> memref<1x!tpu.dma_semaphore, #tpu.memory_space<semaphore_mem>>
      %30 = tpu.memref_squeeze %29 : memref<1x!tpu.dma_semaphore, #tpu.memory_space<semaphore_mem>> -> memref<!tpu.dma_semaphore, #tpu.memory_space<semaphore_mem>>
      tpu.enqueue_dma source(%26 : memref<128xf32, #tpu.memory_space<any>>) target(%28 : memref<128xf32, #tpu.memory_space<vmem>>) target_semaphore(%30 : memref<!tpu.dma_semaphore, #tpu.memory_space<semaphore_mem>>)
      %c3 = arith.constant 3 : index
      %31 = memref.load %arg1[%c3] : memref<8xi32, #tpu.memory_space<smem>>
      %c3_i32 = arith.constant 3 : i32
      %c3_i32_19 = arith.constant 3 : i32
      %c0_i32_20 = arith.constant 0 : i32
      %32 = tpu.memref_slice %arg2[%31, %c0_i32_20] : memref<50x128xf32, #tpu.memory_space<any>> -> memref<1x128xf32, #tpu.memory_space<any>>
      %33 = tpu.memref_squeeze %32 : memref<1x128xf32, #tpu.memory_space<any>> -> memref<128xf32, #tpu.memory_space<any>>
      %c0_i32_21 = arith.constant 0 : i32
      %34 = tpu.memref_slice %arg14[%c3_i32, %c0_i32_21] : memref<8x128xf32, #tpu.memory_space<vmem>> -> memref<1x128xf32, #tpu.memory_space<vmem>>
      %35 = tpu.memref_squeeze %34 : memref<1x128xf32, #tpu.memory_space<vmem>> -> memref<128xf32, #tpu.memory_space<vmem>>
      %36 = tpu.memref_slice %arg16[%c3_i32_19] : memref<8x!tpu.dma_semaphore, #tpu.memory_space<semaphore_mem>> -> memref<1x!tpu.dma_semaphore, #tpu.memory_space<semaphore_mem>>
      %37 = tpu.memref_squeeze %36 : memref<1x!tpu.dma_semaphore, #tpu.memory_space<semaphore_mem>> -> memref<!tpu.dma_semaphore, #tpu.memory_space<semaphore_mem>>
      tpu.enqueue_dma source(%33 : memref<128xf32, #tpu.memory_space<any>>) target(%35 : memref<128xf32, #tpu.memory_space<vmem>>) target_semaphore(%37 : memref<!tpu.dma_semaphore, #tpu.memory_space<semaphore_mem>>)
      %c4 = arith.constant 4 : index
      %38 = memref.load %arg1[%c4] : memref<8xi32, #tpu.memory_space<smem>>
      %c4_i32 = arith.constant 4 : i32
      %c4_i32_22 = arith.constant 4 : i32
      %c0_i32_23 = arith.constant 0 : i32
      %39 = tpu.memref_slice %arg2[%38, %c0_i32_23] : memref<50x128xf32, #tpu.memory_space<any>> -> memref<1x128xf32, #tpu.memory_space<any>>
      %40 = tpu.memref_squeeze %39 : memref<1x128xf32, #tpu.memory_space<any>> -> memref<128xf32, #tpu.memory_space<any>>
      %c0_i32_24 = arith.constant 0 : i32
      %41 = tpu.memref_slice %arg14[%c4_i32, %c0_i32_24] : memref<8x128xf32, #tpu.memory_space<vmem>> -> memref<1x128xf32, #tpu.memory_space<vmem>>
      %42 = tpu.memref_squeeze %41 : memref<1x128xf32, #tpu.memory_space<vmem>> -> memref<128xf32, #tpu.memory_space<vmem>>
      %43 = tpu.memref_slice %arg16[%c4_i32_22] : memref<8x!tpu.dma_semaphore, #tpu.memory_space<semaphore_mem>> -> memref<1x!tpu.dma_semaphore, #tpu.memory_space<semaphore_mem>>
      %44 = tpu.memref_squeeze %43 : memref<1x!tpu.dma_semaphore, #tpu.memory_space<semaphore_mem>> -> memref<!tpu.dma_semaphore, #tpu.memory_space<semaphore_mem>>
      tpu.enqueue_dma source(%40 : memref<128xf32, #tpu.memory_space<any>>) target(%42 : memref<128xf32, #tpu.memory_space<vmem>>) target_semaphore(%44 : memref<!tpu.dma_semaphore, #tpu.memory_space<semaphore_mem>>)
      %c5 = arith.constant 5 : index
      %45 = memref.load %arg1[%c5] : memref<8xi32, #tpu.memory_space<smem>>
      %c5_i32 = arith.constant 5 : i32
      %c5_i32_25 = arith.constant 5 : i32
      %c0_i32_26 = arith.constant 0 : i32
      %46 = tpu.memref_slice %arg2[%45, %c0_i32_26] : memref<50x128xf32, #tpu.memory_space<any>> -> memref<1x128xf32, #tpu.memory_space<any>>
      %47 = tpu.memref_squeeze %46 : memref<1x128xf32, #tpu.memory_space<any>> -> memref<128xf32, #tpu.memory_space<any>>
      %c0_i32_27 = arith.constant 0 : i32
      %48 = tpu.memref_slice %arg14[%c5_i32, %c0_i32_27] : memref<8x128xf32, #tpu.memory_space<vmem>> -> memref<1x128xf32, #tpu.memory_space<vmem>>
      %49 = tpu.memref_squeeze %48 : memref<1x128xf32, #tpu.memory_space<vmem>> -> memref<128xf32, #tpu.memory_space<vmem>>
      %50 = tpu.memref_slice %arg16[%c5_i32_25] : memref<8x!tpu.dma_semaphore, #tpu.memory_space<semaphore_mem>> -> memref<1x!tpu.dma_semaphore, #tpu.memory_space<semaphore_mem>>
      %51 = tpu.memref_squeeze %50 : memref<1x!tpu.dma_semaphore, #tpu.memory_space<semaphore_mem>> -> memref<!tpu.dma_semaphore, #tpu.memory_space<semaphore_mem>>
      tpu.enqueue_dma source(%47 : memref<128xf32, #tpu.memory_space<any>>) target(%49 : memref<128xf32, #tpu.memory_space<vmem>>) target_semaphore(%51 : memref<!tpu.dma_semaphore, #tpu.memory_space<semaphore_mem>>)
      %c6 = arith.constant 6 : index
      %52 = memref.load %arg1[%c6] : memref<8xi32, #tpu.memory_space<smem>>
      %c6_i32 = arith.constant 6 : i32
      %c6_i32_28 = arith.constant 6 : i32
      %c0_i32_29 = arith.constant 0 : i32
      %53 = tpu.memref_slice %arg2[%52, %c0_i32_29] : memref<50x128xf32, #tpu.memory_space<any>> -> memref<1x128xf32, #tpu.memory_space<any>>
      %54 = tpu.memref_squeeze %53 : memref<1x128xf32, #tpu.memory_space<any>> -> memref<128xf32, #tpu.memory_space<any>>
      %c0_i32_30 = arith.constant 0 : i32
      %55 = tpu.memref_slice %arg14[%c6_i32, %c0_i32_30] : memref<8x128xf32, #tpu.memory_space<vmem>> -> memref<1x128xf32, #tpu.memory_space<vmem>>
      %56 = tpu.memref_squeeze %55 : memref<1x128xf32, #tpu.memory_space<vmem>> -> memref<128xf32, #tpu.memory_space<vmem>>
      %57 = tpu.memref_slice %arg16[%c6_i32_28] : memref<8x!tpu.dma_semaphore, #tpu.memory_space<semaphore_mem>> -> memref<1x!tpu.dma_semaphore, #tpu.memory_space<semaphore_mem>>
      %58 = tpu.memref_squeeze %57 : memref<1x!tpu.dma_semaphore, #tpu.memory_space<semaphore_mem>> -> memref<!tpu.dma_semaphore, #tpu.memory_space<semaphore_mem>>
      tpu.enqueue_dma source(%54 : memref<128xf32, #tpu.memory_space<any>>) target(%56 : memref<128xf32, #tpu.memory_space<vmem>>) target_semaphore(%58 : memref<!tpu.dma_semaphore, #tpu.memory_space<semaphore_mem>>)
      %c7 = arith.constant 7 : index
      %59 = memref.load %arg1[%c7] : memref<8xi32, #tpu.memory_space<smem>>
      %c7_i32 = arith.constant 7 : i32
      %c7_i32_31 = arith.constant 7 : i32
      %c0_i32_32 = arith.constant 0 : i32
      %60 = tpu.memref_slice %arg2[%59, %c0_i32_32] : memref<50x128xf32, #tpu.memory_space<any>> -> memref<1x128xf32, #tpu.memory_space<any>>
      %61 = tpu.memref_squeeze %60 : memref<1x128xf32, #tpu.memory_space<any>> -> memref<128xf32, #tpu.memory_space<any>>
      %c0_i32_33 = arith.constant 0 : i32
      %62 = tpu.memref_slice %arg14[%c7_i32, %c0_i32_33] : memref<8x128xf32, #tpu.memory_space<vmem>> -> memref<1x128xf32, #tpu.memory_space<vmem>>
      %63 = tpu.memref_squeeze %62 : memref<1x128xf32, #tpu.memory_space<vmem>> -> memref<128xf32, #tpu.memory_space<vmem>>
      %64 = tpu.memref_slice %arg16[%c7_i32_31] : memref<8x!tpu.dma_semaphore, #tpu.memory_space<semaphore_mem>> -> memref<1x!tpu.dma_semaphore, #tpu.memory_space<semaphore_mem>>
      %65 = tpu.memref_squeeze %64 : memref<1x!tpu.dma_semaphore, #tpu.memory_space<semaphore_mem>> -> memref<!tpu.dma_semaphore, #tpu.memory_space<semaphore_mem>>
      tpu.enqueue_dma source(%61 : memref<128xf32, #tpu.memory_space<any>>) target(%63 : memref<128xf32, #tpu.memory_space<vmem>>) target_semaphore(%65 : memref<!tpu.dma_semaphore, #tpu.memory_space<semaphore_mem>>)
      %c0_i32_34 = arith.constant 0 : i32
      %c0_i32_35 = arith.constant 0 : i32
      %c0_i32_36 = arith.constant 0 : i32
      %66 = tpu.memref_slice %arg2[%10, %c0_i32_36] : memref<50x128xf32, #tpu.memory_space<any>> -> memref<1x128xf32, #tpu.memory_space<any>>
      %67 = tpu.memref_squeeze %66 : memref<1x128xf32, #tpu.memory_space<any>> -> memref<128xf32, #tpu.memory_space<any>>
      %c0_i32_37 = arith.constant 0 : i32
      %68 = tpu.memref_slice %arg14[%c0_i32_34, %c0_i32_37] : memref<8x128xf32, #tpu.memory_space<vmem>> -> memref<1x128xf32, #tpu.memory_space<vmem>>
      %69 = tpu.memref_squeeze %68 : memref<1x128xf32, #tpu.memory_space<vmem>> -> memref<128xf32, #tpu.memory_space<vmem>>
      %70 = tpu.memref_slice %arg16[%c0_i32_35] : memref<8x!tpu.dma_semaphore, #tpu.memory_space<semaphore_mem>> -> memref<1x!tpu.dma_semaphore, #tpu.memory_space<semaphore_mem>>
      %71 = tpu.memref_squeeze %70 : memref<1x!tpu.dma_semaphore, #tpu.memory_space<semaphore_mem>> -> memref<!tpu.dma_semaphore, #tpu.memory_space<semaphore_mem>>
      tpu.wait_dma2 semaphore(%71 : memref<!tpu.dma_semaphore, #tpu.memory_space<semaphore_mem>>) src(%67 : memref<128xf32, #tpu.memory_space<any>>) dst(%69 : memref<128xf32, #tpu.memory_space<vmem>>)
      %c1_i32_38 = arith.constant 1 : i32
      %c1_i32_39 = arith.constant 1 : i32
      %c0_i32_40 = arith.constant 0 : i32
      %72 = tpu.memref_slice %arg2[%17, %c0_i32_40] : memref<50x128xf32, #tpu.memory_space<any>> -> memref<1x128xf32, #tpu.memory_space<any>>
      %73 = tpu.memref_squeeze %72 : memref<1x128xf32, #tpu.memory_space<any>> -> memref<128xf32, #tpu.memory_space<any>>
      %c0_i32_41 = arith.constant 0 : i32
      %74 = tpu.memref_slice %arg14[%c1_i32_38, %c0_i32_41] : memref<8x128xf32, #tpu.memory_space<vmem>> -> memref<1x128xf32, #tpu.memory_space<vmem>>
      %75 = tpu.memref_squeeze %74 : memref<1x128xf32, #tpu.memory_space<vmem>> -> memref<128xf32, #tpu.memory_space<vmem>>
      %76 = tpu.memref_slice %arg16[%c1_i32_39] : memref<8x!tpu.dma_semaphore, #tpu.memory_space<semaphore_mem>> -> memref<1x!tpu.dma_semaphore, #tpu.memory_space<semaphore_mem>>
      %77 = tpu.memref_squeeze %76 : memref<1x!tpu.dma_semaphore, #tpu.memory_space<semaphore_mem>> -> memref<!tpu.dma_semaphore, #tpu.memory_space<semaphore_mem>>
      tpu.wait_dma2 semaphore(%77 : memref<!tpu.dma_semaphore, #tpu.memory_space<semaphore_mem>>) src(%73 : memref<128xf32, #tpu.memory_space<any>>) dst(%75 : memref<128xf32, #tpu.memory_space<vmem>>)
      %c2_i32_42 = arith.constant 2 : i32
      %c2_i32_43 = arith.constant 2 : i32
      %c0_i32_44 = arith.constant 0 : i32
      %78 = tpu.memref_slice %arg2[%24, %c0_i32_44] : memref<50x128xf32, #tpu.memory_space<any>> -> memref<1x128xf32, #tpu.memory_space<any>>
      %79 = tpu.memref_squeeze %78 : memref<1x128xf32, #tpu.memory_space<any>> -> memref<128xf32, #tpu.memory_space<any>>
      %c0_i32_45 = arith.constant 0 : i32
      %80 = tpu.memref_slice %arg14[%c2_i32_42, %c0_i32_45] : memref<8x128xf32, #tpu.memory_space<vmem>> -> memref<1x128xf32, #tpu.memory_space<vmem>>
      %81 = tpu.memref_squeeze %80 : memref<1x128xf32, #tpu.memory_space<vmem>> -> memref<128xf32, #tpu.memory_space<vmem>>
      %82 = tpu.memref_slice %arg16[%c2_i32_43] : memref<8x!tpu.dma_semaphore, #tpu.memory_space<semaphore_mem>> -> memref<1x!tpu.dma_semaphore, #tpu.memory_space<semaphore_mem>>
      %83 = tpu.memref_squeeze %82 : memref<1x!tpu.dma_semaphore, #tpu.memory_space<semaphore_mem>> -> memref<!tpu.dma_semaphore, #tpu.memory_space<semaphore_mem>>
      tpu.wait_dma2 semaphore(%83 : memref<!tpu.dma_semaphore, #tpu.memory_space<semaphore_mem>>) src(%79 : memref<128xf32, #tpu.memory_space<any>>) dst(%81 : memref<128xf32, #tpu.memory_space<vmem>>)
      %c3_i32_46 = arith.constant 3 : i32
      %c3_i32_47 = arith.constant 3 : i32
      %c0_i32_48 = arith.constant 0 : i32
      %84 = tpu.memref_slice %arg2[%31, %c0_i32_48] : memref<50x128xf32, #tpu.memory_space<any>> -> memref<1x128xf32, #tpu.memory_space<any>>
      %85 = tpu.memref_squeeze %84 : memref<1x128xf32, #tpu.memory_space<any>> -> memref<128xf32, #tpu.memory_space<any>>
      %c0_i32_49 = arith.constant 0 : i32
      %86 = tpu.memref_slice %arg14[%c3_i32_46, %c0_i32_49] : memref<8x128xf32, #tpu.memory_space<vmem>> -> memref<1x128xf32, #tpu.memory_space<vmem>>
      %87 = tpu.memref_squeeze %86 : memref<1x128xf32, #tpu.memory_space<vmem>> -> memref<128xf32, #tpu.memory_space<vmem>>
      %88 = tpu.memref_slice %arg16[%c3_i32_47] : memref<8x!tpu.dma_semaphore, #tpu.memory_space<semaphore_mem>> -> memref<1x!tpu.dma_semaphore, #tpu.memory_space<semaphore_mem>>
      %89 = tpu.memref_squeeze %88 : memref<1x!tpu.dma_semaphore, #tpu.memory_space<semaphore_mem>> -> memref<!tpu.dma_semaphore, #tpu.memory_space<semaphore_mem>>
      tpu.wait_dma2 semaphore(%89 : memref<!tpu.dma_semaphore, #tpu.memory_space<semaphore_mem>>) src(%85 : memref<128xf32, #tpu.memory_space<any>>) dst(%87 : memref<128xf32, #tpu.memory_space<vmem>>)
      %c4_i32_50 = arith.constant 4 : i32
      %c4_i32_51 = arith.constant 4 : i32
      %c0_i32_52 = arith.constant 0 : i32
      %90 = tpu.memref_slice %arg2[%38, %c0_i32_52] : memref<50x128xf32, #tpu.memory_space<any>> -> memref<1x128xf32, #tpu.memory_space<any>>
      %91 = tpu.memref_squeeze %90 : memref<1x128xf32, #tpu.memory_space<any>> -> memref<128xf32, #tpu.memory_space<any>>
      %c0_i32_53 = arith.constant 0 : i32
      %92 = tpu.memref_slice %arg14[%c4_i32_50, %c0_i32_53] : memref<8x128xf32, #tpu.memory_space<vmem>> -> memref<1x128xf32, #tpu.memory_space<vmem>>
      %93 = tpu.memref_squeeze %92 : memref<1x128xf32, #tpu.memory_space<vmem>> -> memref<128xf32, #tpu.memory_space<vmem>>
      %94 = tpu.memref_slice %arg16[%c4_i32_51] : memref<8x!tpu.dma_semaphore, #tpu.memory_space<semaphore_mem>> -> memref<1x!tpu.dma_semaphore, #tpu.memory_space<semaphore_mem>>
      %95 = tpu.memref_squeeze %94 : memref<1x!tpu.dma_semaphore, #tpu.memory_space<semaphore_mem>> -> memref<!tpu.dma_semaphore, #tpu.memory_space<semaphore_mem>>
      tpu.wait_dma2 semaphore(%95 : memref<!tpu.dma_semaphore, #tpu.memory_space<semaphore_mem>>) src(%91 : memref<128xf32, #tpu.memory_space<any>>) dst(%93 : memref<128xf32, #tpu.memory_space<vmem>>)
      %c5_i32_54 = arith.constant 5 : i32
      %c5_i32_55 = arith.constant 5 : i32
      %c0_i32_56 = arith.constant 0 : i32
      %96 = tpu.memref_slice %arg2[%45, %c0_i32_56] : memref<50x128xf32, #tpu.memory_space<any>> -> memref<1x128xf32, #tpu.memory_space<any>>
      %97 = tpu.memref_squeeze %96 : memref<1x128xf32, #tpu.memory_space<any>> -> memref<128xf32, #tpu.memory_space<any>>
      %c0_i32_57 = arith.constant 0 : i32
      %98 = tpu.memref_slice %arg14[%c5_i32_54, %c0_i32_57] : memref<8x128xf32, #tpu.memory_space<vmem>> -> memref<1x128xf32, #tpu.memory_space<vmem>>
      %99 = tpu.memref_squeeze %98 : memref<1x128xf32, #tpu.memory_space<vmem>> -> memref<128xf32, #tpu.memory_space<vmem>>
      %100 = tpu.memref_slice %arg16[%c5_i32_55] : memref<8x!tpu.dma_semaphore, #tpu.memory_space<semaphore_mem>> -> memref<1x!tpu.dma_semaphore, #tpu.memory_space<semaphore_mem>>
      %101 = tpu.memref_squeeze %100 : memref<1x!tpu.dma_semaphore, #tpu.memory_space<semaphore_mem>> -> memref<!tpu.dma_semaphore, #tpu.memory_space<semaphore_mem>>
      tpu.wait_dma2 semaphore(%101 : memref<!tpu.dma_semaphore, #tpu.memory_space<semaphore_mem>>) src(%97 : memref<128xf32, #tpu.memory_space<any>>) dst(%99 : memref<128xf32, #tpu.memory_space<vmem>>)
      %c6_i32_58 = arith.constant 6 : i32
      %c6_i32_59 = arith.constant 6 : i32
      %c0_i32_60 = arith.constant 0 : i32
      %102 = tpu.memref_slice %arg2[%52, %c0_i32_60] : memref<50x128xf32, #tpu.memory_space<any>> -> memref<1x128xf32, #tpu.memory_space<any>>
      %103 = tpu.memref_squeeze %102 : memref<1x128xf32, #tpu.memory_space<any>> -> memref<128xf32, #tpu.memory_space<any>>
      %c0_i32_61 = arith.constant 0 : i32
      %104 = tpu.memref_slice %arg14[%c6_i32_58, %c0_i32_61] : memref<8x128xf32, #tpu.memory_space<vmem>> -> memref<1x128xf32, #tpu.memory_space<vmem>>
      %105 = tpu.memref_squeeze %104 : memref<1x128xf32, #tpu.memory_space<vmem>> -> memref<128xf32, #tpu.memory_space<vmem>>
      %106 = tpu.memref_slice %arg16[%c6_i32_59] : memref<8x!tpu.dma_semaphore, #tpu.memory_space<semaphore_mem>> -> memref<1x!tpu.dma_semaphore, #tpu.memory_space<semaphore_mem>>
      %107 = tpu.memref_squeeze %106 : memref<1x!tpu.dma_semaphore, #tpu.memory_space<semaphore_mem>> -> memref<!tpu.dma_semaphore, #tpu.memory_space<semaphore_mem>>
      tpu.wait_dma2 semaphore(%107 : memref<!tpu.dma_semaphore, #tpu.memory_space<semaphore_mem>>) src(%103 : memref<128xf32, #tpu.memory_space<any>>) dst(%105 : memref<128xf32, #tpu.memory_space<vmem>>)
      %c7_i32_62 = arith.constant 7 : i32
      %c7_i32_63 = arith.constant 7 : i32
      %c0_i32_64 = arith.constant 0 : i32
      %108 = tpu.memref_slice %arg2[%59, %c0_i32_64] : memref<50x128xf32, #tpu.memory_space<any>> -> memref<1x128xf32, #tpu.memory_space<any>>
      %109 = tpu.memref_squeeze %108 : memref<1x128xf32, #tpu.memory_space<any>> -> memref<128xf32, #tpu.memory_space<any>>
      %c0_i32_65 = arith.constant 0 : i32
      %110 = tpu.memref_slice %arg14[%c7_i32_62, %c0_i32_65] : memref<8x128xf32, #tpu.memory_space<vmem>> -> memref<1x128xf32, #tpu.memory_space<vmem>>
      %111 = tpu.memref_squeeze %110 : memref<1x128xf32, #tpu.memory_space<vmem>> -> memref<128xf32, #tpu.memory_space<vmem>>
      %112 = tpu.memref_slice %arg16[%c7_i32_63] : memref<8x!tpu.dma_semaphore, #tpu.memory_space<semaphore_mem>> -> memref<1x!tpu.dma_semaphore, #tpu.memory_space<semaphore_mem>>
      %113 = tpu.memref_squeeze %112 : memref<1x!tpu.dma_semaphore, #tpu.memory_space<semaphore_mem>> -> memref<!tpu.dma_semaphore, #tpu.memory_space<semaphore_mem>>
      tpu.wait_dma2 semaphore(%113 : memref<!tpu.dma_semaphore, #tpu.memory_space<semaphore_mem>>) src(%109 : memref<128xf32, #tpu.memory_space<any>>) dst(%111 : memref<128xf32, #tpu.memory_space<vmem>>)
      %c0_66 = arith.constant 0 : index
      %c0_67 = arith.constant 0 : index
      %114 = vector.load %arg14[%c0_66, %c0_67] : memref<8x128xf32, #tpu.memory_space<vmem>>, vector<8x128xf32>
      %115 = arith.truncf %114 : vector<8x128xf32> to vector<8x128xbf16>
      %c0_68 = arith.constant 0 : index
      %c0_69 = arith.constant 0 : index
      %c0_70 = arith.constant 0 : index
      %116 = vector.load %arg3[%c0_68, %c0_69, %c0_70] : memref<2x8x128xf32, #tpu.memory_space<vmem>>, vector<1x8x128xf32>
      %117 = vector.shape_cast %116 : vector<1x8x128xf32> to vector<8x128xf32>
      %c0_71 = arith.constant 0 : index
      %c0_72 = arith.constant 0 : index
      %c0_73 = arith.constant 0 : index
      %118 = vector.load %arg4[%c0_71, %c0_72, %c0_73] : memref<2x8x128xf32, #tpu.memory_space<vmem>>, vector<1x8x128xf32>
      %119 = vector.shape_cast %118 : vector<1x8x128xf32> to vector<8x128xf32>
      %120 = arith.truncf %117 : vector<8x128xf32> to vector<8x128xbf16>
      %121 = tpu.concatenate %115, %120 in 1 : vector<8x128xbf16>, vector<8x128xbf16> -> vector<8x256xbf16>
      %c0_74 = arith.constant 0 : index
      %c0_75 = arith.constant 0 : index
      %122 = vector.load %arg5[%c0_74, %c0_75] : memref<256x512xbf16, #tpu.memory_space<vmem>>, vector<256x512xbf16>
      %cst_76 = arith.constant dense<0.000000e+00> : vector<8x512xf32>
      %123 = tpu.matmul %121, %122, %cst_76 {dimension_numbers = #tpu.dot_dimension_numbers<[1], [0], [0], [1], [0, 0, 1, 1], [], []>} : vector<8x256xbf16>, vector<256x512xbf16>, vector<8x512xf32> -> vector<8x512xf32>
      %c0_77 = arith.constant 0 : index
      %c0_78 = arith.constant 0 : index
      %124 = vector.load %arg7[%c0_77, %c0_78] : memref<1x512xf32, #tpu.memory_space<vmem>>, vector<1x512xf32>
      %125 = vector.broadcast %124 : vector<1x512xf32> to vector<8x512xf32>
      %126 = arith.addf %123, %125 : vector<8x512xf32>
      %127 = vector.extract_strided_slice %126 {offsets = [0, 0], sizes = [8, 128], strides = [1, 1]} : vector<8x512xf32> to vector<8x128xf32>
      %128 = arith.negf %127 : vector<8x128xf32>
      %129 = math.exp %128 : vector<8x128xf32>
      %cst_79 = arith.constant 1.000000e+00 : f32
      %130 = vector.broadcast %cst_79 : f32 to vector<8x128xf32>
      %131 = arith.addf %130, %129 : vector<8x128xf32>
      %132 = arith.divf %130, %131 : vector<8x128xf32>
      %133 = vector.extract_strided_slice %126 {offsets = [0, 128], sizes = [8, 128], strides = [1, 1]} : vector<8x512xf32> to vector<8x128xf32>
      %134 = arith.negf %133 : vector<8x128xf32>
      %135 = math.exp %134 : vector<8x128xf32>
      %cst_80 = arith.constant 1.000000e+00 : f32
      %136 = vector.broadcast %cst_80 : f32 to vector<8x128xf32>
      %137 = arith.addf %136, %135 : vector<8x128xf32>
      %138 = arith.divf %136, %137 : vector<8x128xf32>
      %139 = vector.extract_strided_slice %126 {offsets = [0, 256], sizes = [8, 128], strides = [1, 1]} : vector<8x512xf32> to vector<8x128xf32>
      %140 = math.tanh %139 : vector<8x128xf32>
      %141 = vector.extract_strided_slice %126 {offsets = [0, 384], sizes = [8, 128], strides = [1, 1]} : vector<8x512xf32> to vector<8x128xf32>
      %142 = arith.negf %141 : vector<8x128xf32>
      %143 = math.exp %142 : vector<8x128xf32>
      %cst_81 = arith.constant 1.000000e+00 : f32
      %144 = vector.broadcast %cst_81 : f32 to vector<8x128xf32>
      %145 = arith.addf %144, %143 : vector<8x128xf32>
      %146 = arith.divf %144, %145 : vector<8x128xf32>
      %147 = arith.mulf %138, %119 : vector<8x128xf32>
      %148 = arith.mulf %132, %140 : vector<8x128xf32>
      %149 = arith.addf %147, %148 : vector<8x128xf32>
      %150 = math.tanh %149 : vector<8x128xf32>
      %151 = arith.mulf %146, %150 : vector<8x128xf32>
      %c0_82 = arith.constant 0 : index
      %c0_83 = arith.constant 0 : index
      %c0_84 = arith.constant 0 : index
      %152 = vector.load %arg12[%c0_82, %c0_83, %c0_84] : memref<2x8x128xf32, #tpu.memory_space<vmem>>, vector<1x8x128xf32>
      %153 = vector.shape_cast %152 : vector<1x8x128xf32> to vector<8x128xf32>
      %154 = vector.shape_cast %151 : vector<8x128xf32> to vector<1x8x128xf32>
      tpu.vector_store %arg12[%c0_82, %c0_83, %c0_84], %154 {strides = array<i32>} : memref<2x8x128xf32, #tpu.memory_space<vmem>>, vector<1x8x128xf32>,
      %c0_85 = arith.constant 0 : index
      %c0_86 = arith.constant 0 : index
      %c0_87 = arith.constant 0 : index
      %155 = vector.load %arg13[%c0_85, %c0_86, %c0_87] : memref<2x8x128xf32, #tpu.memory_space<vmem>>, vector<1x8x128xf32>
      %156 = vector.shape_cast %155 : vector<1x8x128xf32> to vector<8x128xf32>
      %157 = vector.shape_cast %149 : vector<8x128xf32> to vector<1x8x128xf32>
      tpu.vector_store %arg13[%c0_85, %c0_86, %c0_87], %157 {strides = array<i32>} : memref<2x8x128xf32, #tpu.memory_space<vmem>>, vector<1x8x128xf32>,
      %158 = arith.truncf %151 : vector<8x128xf32> to vector<8x128xbf16>
      %c1_88 = arith.constant 1 : index
      %c0_89 = arith.constant 0 : index
      %c0_90 = arith.constant 0 : index
      %159 = vector.load %arg3[%c1_88, %c0_89, %c0_90] : memref<2x8x128xf32, #tpu.memory_space<vmem>>, vector<1x8x128xf32>
      %160 = vector.shape_cast %159 : vector<1x8x128xf32> to vector<8x128xf32>
      %c1_91 = arith.constant 1 : index
      %c0_92 = arith.constant 0 : index
      %c0_93 = arith.constant 0 : index
      %161 = vector.load %arg4[%c1_91, %c0_92, %c0_93] : memref<2x8x128xf32, #tpu.memory_space<vmem>>, vector<1x8x128xf32>
      %162 = vector.shape_cast %161 : vector<1x8x128xf32> to vector<8x128xf32>
      %163 = arith.truncf %160 : vector<8x128xf32> to vector<8x128xbf16>
      %164 = tpu.concatenate %158, %163 in 1 : vector<8x128xbf16>, vector<8x128xbf16> -> vector<8x256xbf16>
      %c0_94 = arith.constant 0 : index
      %c0_95 = arith.constant 0 : index
      %165 = vector.load %arg6[%c0_94, %c0_95] : memref<256x512xbf16, #tpu.memory_space<vmem>>, vector<256x512xbf16>
      %cst_96 = arith.constant dense<0.000000e+00> : vector<8x512xf32>
      %166 = tpu.matmul %164, %165, %cst_96 {dimension_numbers = #tpu.dot_dimension_numbers<[1], [0], [0], [1], [0, 0, 1, 1], [], []>} : vector<8x256xbf16>, vector<256x512xbf16>, vector<8x512xf32> -> vector<8x512xf32>
      %c0_97 = arith.constant 0 : index
      %c0_98 = arith.constant 0 : index
      %167 = vector.load %arg8[%c0_97, %c0_98] : memref<1x512xf32, #tpu.memory_space<vmem>>, vector<1x512xf32>
      %168 = vector.broadcast %167 : vector<1x512xf32> to vector<8x512xf32>
      %169 = arith.addf %166, %168 : vector<8x512xf32>
      %170 = vector.extract_strided_slice %169 {offsets = [0, 0], sizes = [8, 128], strides = [1, 1]} : vector<8x512xf32> to vector<8x128xf32>
      %171 = arith.negf %170 : vector<8x128xf32>
      %172 = math.exp %171 : vector<8x128xf32>
      %cst_99 = arith.constant 1.000000e+00 : f32
      %173 = vector.broadcast %cst_99 : f32 to vector<8x128xf32>
      %174 = arith.addf %173, %172 : vector<8x128xf32>
      %175 = arith.divf %173, %174 : vector<8x128xf32>
      %176 = vector.extract_strided_slice %169 {offsets = [0, 128], sizes = [8, 128], strides = [1, 1]} : vector<8x512xf32> to vector<8x128xf32>
      %177 = arith.negf %176 : vector<8x128xf32>
      %178 = math.exp %177 : vector<8x128xf32>
      %cst_100 = arith.constant 1.000000e+00 : f32
      %179 = vector.broadcast %cst_100 : f32 to vector<8x128xf32>
      %180 = arith.addf %179, %178 : vector<8x128xf32>
      %181 = arith.divf %179, %180 : vector<8x128xf32>
      %182 = vector.extract_strided_slice %169 {offsets = [0, 256], sizes = [8, 128], strides = [1, 1]} : vector<8x512xf32> to vector<8x128xf32>
      %183 = math.tanh %182 : vector<8x128xf32>
      %184 = vector.extract_strided_slice %169 {offsets = [0, 384], sizes = [8, 128], strides = [1, 1]} : vector<8x512xf32> to vector<8x128xf32>
      %185 = arith.negf %184 : vector<8x128xf32>
      %186 = math.exp %185 : vector<8x128xf32>
      %cst_101 = arith.constant 1.000000e+00 : f32
      %187 = vector.broadcast %cst_101 : f32 to vector<8x128xf32>
      %188 = arith.addf %187, %186 : vector<8x128xf32>
      %189 = arith.divf %187, %188 : vector<8x128xf32>
      %190 = arith.mulf %181, %162 : vector<8x128xf32>
      %191 = arith.mulf %175, %183 : vector<8x128xf32>
      %192 = arith.addf %190, %191 : vector<8x128xf32>
      %193 = math.tanh %192 : vector<8x128xf32>
      %194 = arith.mulf %189, %193 : vector<8x128xf32>
      %c1_102 = arith.constant 1 : index
      %c0_103 = arith.constant 0 : index
      %c0_104 = arith.constant 0 : index
      %195 = vector.load %arg12[%c1_102, %c0_103, %c0_104] : memref<2x8x128xf32, #tpu.memory_space<vmem>>, vector<1x8x128xf32>
      %196 = vector.shape_cast %195 : vector<1x8x128xf32> to vector<8x128xf32>
      %197 = vector.shape_cast %194 : vector<8x128xf32> to vector<1x8x128xf32>
      tpu.vector_store %arg12[%c1_102, %c0_103, %c0_104], %197 {strides = array<i32>} : memref<2x8x128xf32, #tpu.memory_space<vmem>>, vector<1x8x128xf32>,
      %c1_105 = arith.constant 1 : index
      %c0_106 = arith.constant 0 : index
      %c0_107 = arith.constant 0 : index
      %198 = vector.load %arg13[%c1_105, %c0_106, %c0_107] : memref<2x8x128xf32, #tpu.memory_space<vmem>>, vector<1x8x128xf32>
      %199 = vector.shape_cast %198 : vector<1x8x128xf32> to vector<8x128xf32>
      %200 = vector.shape_cast %192 : vector<8x128xf32> to vector<1x8x128xf32>
      tpu.vector_store %arg13[%c1_105, %c0_106, %c0_107], %200 {strides = array<i32>} : memref<2x8x128xf32, #tpu.memory_space<vmem>>, vector<1x8x128xf32>,
      %201 = arith.truncf %194 : vector<8x128xf32> to vector<8x128xbf16>
      %c0_108 = arith.constant 0 : index
      %c0_109 = arith.constant 0 : index
      %202 = vector.load %arg15[%c0_108, %c0_109] : memref<8x128xbf16, #tpu.memory_space<vmem>>, vector<8x128xbf16>
      tpu.vector_store %arg15[%c0_108, %c0_109], %201 {strides = array<i32>} : memref<8x128xbf16, #tpu.memory_space<vmem>>, vector<8x128xbf16>,
    } else {
    }
    %c0 = arith.constant 0 : index
    %c0_1 = arith.constant 0 : index
    %3 = vector.load %arg15[%c0, %c0_1] : memref<8x128xbf16, #tpu.memory_space<vmem>>, vector<8x128xbf16>
    %c0_2 = arith.constant 0 : index
    %c0_3 = arith.constant 0 : index
    %4 = vector.load %arg9[%c0_2, %c0_3] : memref<128x128xbf16, #tpu.memory_space<vmem>>, vector<128x128xbf16>
    %cst = arith.constant dense<0.000000e+00> : vector<8x128xf32>
    %5 = tpu.matmul %3, %4, %cst {dimension_numbers = #tpu.dot_dimension_numbers<[1], [0], [0], [1], [0, 0, 1, 1], [], []>} : vector<8x128xbf16>, vector<128x128xbf16>, vector<8x128xf32> -> vector<8x128xf32>
    %c0_4 = arith.constant 0 : index
    %c0_5 = arith.constant 0 : index
    %6 = vector.load %arg10[%c0_4, %c0_5] : memref<1x128xf32, #tpu.memory_space<vmem>>, vector<1x128xf32>
    %7 = vector.broadcast %6 : vector<1x128xf32> to vector<8x128xf32>
    %8 = arith.addf %5, %7 : vector<8x128xf32>
    %c0_6 = arith.constant 0 : index
    %c0_7 = arith.constant 0 : index
    %9 = vector.load %arg11[%c0_6, %c0_7] : memref<8x128xf32, #tpu.memory_space<vmem>>, vector<8x128xf32>
    tpu.vector_store %arg11[%c0_6, %c0_7], %8 {strides = array<i32>} : memref<8x128xf32, #tpu.memory_space<vmem>>, vector<8x128xf32>,
    return
  }
  func.func @transform_1(%arg0: i32, %arg1: memref<8xi32, #tpu.memory_space<smem>>) -> (i32, i32, i32) {
    %c0_i32 = arith.constant 0 : i32
    %c0_i32_0 = arith.constant 0 : i32
    %c0_i32_1 = arith.constant 0 : i32
    %c0_i32_2 = arith.constant 0 : i32
    return %c0_i32, %c0_i32_0, %c0_i32_1 : i32, i32, i32
  }
  func.func @transform_2(%arg0: i32, %arg1: memref<8xi32, #tpu.memory_space<smem>>) -> (i32, i32, i32) {
    %c0_i32 = arith.constant 0 : i32
    %c0_i32_0 = arith.constant 0 : i32
    %c0_i32_1 = arith.constant 0 : i32
    %c0_i32_2 = arith.constant 0 : i32
    return %c0_i32, %c0_i32_0, %c0_i32_1 : i32, i32, i32
  }
  func.func @transform_3(%arg0: i32, %arg1: memref<8xi32, #tpu.memory_space<smem>>) -> (i32, i32) {
    %c0_i32 = arith.constant 0 : i32
    %c0_i32_0 = arith.constant 0 : i32
    %c0_i32_1 = arith.constant 0 : i32
    return %c0_i32, %c0_i32_0 : i32, i32
  }
  func.func @transform_4(%arg0: i32, %arg1: memref<8xi32, #tpu.memory_space<smem>>) -> (i32, i32) {
    %c0_i32 = arith.constant 0 : i32
    %c0_i32_0 = arith.constant 0 : i32
    %c0_i32_1 = arith.constant 0 : i32
    return %c0_i32, %c0_i32_0 : i32, i32
  }
  func.func @transform_5(%arg0: i32, %arg1: memref<8xi32, #tpu.memory_space<smem>>) -> (i32, i32) {
    %c0_i32 = arith.constant 0 : i32
    %c0_i32_0 = arith.constant 0 : i32
    %c0_i32_1 = arith.constant 0 : i32
    return %c0_i32, %c0_i32_0 : i32, i32
  }
  func.func @transform_6(%arg0: i32, %arg1: memref<8xi32, #tpu.memory_space<smem>>) -> (i32, i32) {
    %c0_i32 = arith.constant 0 : i32
    %c0_i32_0 = arith.constant 0 : i32
    %c0_i32_1 = arith.constant 0 : i32
    return %c0_i32, %c0_i32_0 : i32, i32
  }
  func.func @transform_7(%arg0: i32, %arg1: memref<8xi32, #tpu.memory_space<smem>>) -> (i32, i32) {
    %c0_i32 = arith.constant 0 : i32
    %c0_i32_0 = arith.constant 0 : i32
    return %c0_i32, %arg0 : i32, i32
  }
  func.func @transform_8(%arg0: i32, %arg1: memref<8xi32, #tpu.memory_space<smem>>) -> (i32, i32) {
    %c0_i32 = arith.constant 0 : i32
    %c0_i32_0 = arith.constant 0 : i32
    return %c0_i32, %arg0 : i32, i32
  }
  func.func @transform_9(%arg0: i32, %arg1: memref<8xi32, #tpu.memory_space<smem>>) -> (i32, i32) {
    %c0_i32 = arith.constant 0 : i32
    %c0_i32_0 = arith.constant 0 : i32
    return %c0_i32, %arg0 : i32, i32
  }
  func.func @transform_10(%arg0: i32, %arg1: memref<8xi32, #tpu.memory_space<smem>>) -> (i32, i32, i32) {
    %c0_i32 = arith.constant 0 : i32
    %c0_i32_0 = arith.constant 0 : i32
    %c0_i32_1 = arith.constant 0 : i32
    %c0_i32_2 = arith.constant 0 : i32
    return %c0_i32, %c0_i32_0, %c0_i32_1 : i32, i32, i32
  }
  func.func @transform_11(%arg0: i32, %arg1: memref<8xi32, #tpu.memory_space<smem>>) -> (i32, i32, i32) {
    %c0_i32 = arith.constant 0 : i32
    %c0_i32_0 = arith.constant 0 : i32
    %c0_i32_1 = arith.constant 0 : i32
    %c0_i32_2 = arith.constant 0 : i32
    return %c0_i32, %c0_i32_0, %c0_i32_1 : i32, i32, i32
  }
}

</mosaic_0001>

<llo_original>
// kernel: tpu_custom_call.1
$region0: #{tpu_custom_call.1}
  #allocation0 [shape = 'u32[]', space=smem, size = 0x4, offset = 0x4, fixed_abs, tag = 'smem constant byte address 0x4 - core index']
  #allocation1 [shape = 'u32[144,128]{1,0:T(1,128)}', space=vmem, size = 0x12000, scoped, tag = 'internal scratch']
  #allocation2 [shape = 'f32[8,128]{1,0:T(8,128)}', space=vmem, size = 0x1000, scoped, tag = 'scratch operand']
  #allocation3 [shape = 'bf16[8,128]{1,0:T(8,128)(2,1)}', space=vmem, size = 0x800, scoped, tag = 'scratch operand']
  #allocation4 [shape = 's32[8]{0}', space=sflag, size = 0x20, scoped, tag = 'scratch operand']
  #allocation5 [shape = 's32[1]{0}', space=sflag, size = 0x4, scoped, tag = 'scoped memory for tpu_custom_call.1']
  #allocation6 [shape = 'u8[512]{0}', space=smem, size = 0x200, scoped, tag = 'prefetched SMEM operand 0']
  #allocation20 [shape = 's32[]', space=sflag, size = 0x4, offset = 0, fixed_abs, tag = 'sflag constant byte address 0x0 - dummy sync flag']
  #allocation21 [shape = 's32[]', space=sflag, size = 0x4, offset = 0, fixed_abs, tag = 'sflag constant byte address 0x0 - dummy sync flag']
  #allocation22 [shape = 'u32[]', space=smem, size = 0x4, offset = 0x44, fixed_abs, tag = 'smem constant byte address 0x44 - assertion arg 0']
  #allocation23 [shape = 'u32[]', space=smem, size = 0x4, offset = 0x48, fixed_abs, tag = 'smem constant byte address 0x48 - assertion arg 1']
  #allocation24 [shape = 's32[]', space=sflag, size = 0x4, offset = 0, fixed_abs, tag = 'sflag constant byte address 0x0 - dummy sync flag']
  #allocation25 [shape = 's32[]', space=sflag, size = 0x4, offset = 0, fixed_abs, tag = 'sflag constant byte address 0x0 - dummy sync flag']
  #allocation26 [shape = 's32[]', space=sflag, size = 0x4, offset = 0, fixed_abs, tag = 'sflag constant byte address 0x0 - dummy sync flag']
  #allocation27 [shape = 's32[]', space=sflag, size = 0x4, offset = 0, fixed_abs, tag = 'sflag constant byte address 0x0 - dummy sync flag']
  #allocation28 [shape = 's32[]', space=sflag, size = 0x4, offset = 0, fixed_abs, tag = 'sflag constant byte address 0x0 - dummy sync flag']
  #allocation29 [shape = 's32[]', space=sflag, size = 0x4, offset = 0, fixed_abs, tag = 'sflag constant byte address 0x0 - dummy sync flag']
  #allocation30 [shape = 's32[]', space=sflag, size = 0x4, offset = 0, fixed_abs, tag = 'sflag constant byte address 0x0 - dummy sync flag']
  #allocation31 [shape = 's32[]', space=sflag, size = 0x4, offset = 0, fixed_abs, tag = 'sflag constant byte address 0x0 - dummy sync flag']
  #allocation32 [shape = 's32[]', space=sflag, size = 0x4, offset = 0, fixed_abs, tag = 'sflag constant byte address 0x0 - dummy sync flag']
  #allocation33 [shape = 's32[]', space=sflag, size = 0x4, offset = 0, fixed_abs, tag = 'sflag constant byte address 0x0 - dummy sync flag']
  #allocation34 [shape = 's32[]', space=sflag, size = 0x4, offset = 0, fixed_abs, tag = 'sflag constant byte address 0x0 - dummy sync flag']
  #allocation35 [shape = 's32[]', space=sflag, size = 0x4, offset = 0, fixed_abs, tag = 'sflag constant byte address 0x0 - dummy sync flag']
  #allocation36 [shape = 's32[]', space=sflag, size = 0x4, offset = 0, fixed_abs, tag = 'sflag constant byte address 0x0 - dummy sync flag']
  #allocation37 [shape = 's32[]', space=sflag, size = 0x4, offset = 0, fixed_abs, tag = 'sflag constant byte address 0x0 - dummy sync flag']
  %s0 = inlined_call_operand.hbm [shape: s32[8], index: 0, kind: input, shape index: {}]
  %s1 = inlined_call_operand.hbm [shape: f32[50,128], index: 1, kind: input, shape index: {}]
  %s2 = inlined_call_operand.hbm [shape: f32[2,8,128], index: 2, kind: input, shape index: {}]
  %s3 = inlined_call_operand.hbm [shape: f32[2,8,128], index: 3, kind: input, shape index: {}]
  %s4 = inlined_call_operand.hbm [shape: bf16[256,512], index: 4, kind: input, shape index: {}]
  %s5 = inlined_call_operand.hbm [shape: bf16[256,512], index: 5, kind: input, shape index: {}]
  %s6 = inlined_call_operand.vmem [shape: f32[1,512], index: 6, kind: input, shape index: {}]
  %s7 = inlined_call_operand.vmem [shape: f32[1,512], index: 7, kind: input, shape index: {}]
  %s8 = inlined_call_operand.hbm [shape: bf16[128,128], index: 8, kind: input, shape index: {}]
  %s9 = inlined_call_operand.vmem [shape: f32[1,128], index: 9, kind: input, shape index: {}]
  %s10 = inlined_call_operand.hbm [shape: f32[8,128], index: 10, kind: output, shape index: {0}]
  %s11 = inlined_call_operand.hbm [shape: f32[2,8,128], index: 11, kind: output, shape index: {1}]
  %s12 = inlined_call_operand.hbm [shape: f32[2,8,128], index: 12, kind: output, shape index: {2}]
  %13 = xla_tuple %s10, %s11, %s12
  %s14 = sld [smem:[#allocation0]]
  $region114: #{tpu_custom_call.1} parent=0
    _
  %s16 = ssub.s32 1, %s14
  %s17 = scalar_select 0, %s16, %s14
  %19 = dma.hbm_to_smem %s0, 16, [#allocation6], [#allocation5]
  %20 = dma.done [#allocation5], 16
  %21 = sfence
  $region1: #{tpu_custom_call.1} parent=0
    #allocation7 [shape = 'u8[8192]{0}', space=vmem, size = 0x2000, scoped, tag = 'input window, operand 2, single buffered']
    #allocation8 [shape = 's32[1]{0}', space=sflag, size = 0x4, scoped, tag = 'scoped memory for tpu_custom_call.1']
    #allocation9 [shape = 's32[1]{0}', space=sflag, size = 0x4, scoped, tag = 'scoped memory for tpu_custom_call.1']
    #allocation10 [shape = 'u8[8192]{0}', space=vmem, size = 0x2000, scoped, tag = 'input window, operand 3, single buffered']
    #allocation11 [shape = 's32[1]{0}', space=sflag, size = 0x4, scoped, tag = 'scoped memory for tpu_custom_call.1']
    #allocation12 [shape = 'u8[262144]{0}', space=vmem, size = 0x40000, scoped, tag = 'input window, operand 4, single buffered']
    #allocation13 [shape = 'u8[262144]{0}', space=vmem, size = 0x40000, scoped, tag = 'input window, operand 5, single buffered']
    #allocation14 [shape = 's32[1]{0}', space=sflag, size = 0x4, scoped, tag = 'scoped memory for tpu_custom_call.1']
    #allocation15 [shape = 'u8[32768]{0}', space=vmem, size = 0x8000, scoped, tag = 'input window, operand 8, single buffered']
    #allocation16 [shape = 'u8[4096]{0}', space=vmem, size = 0x1000, scoped, tag = 'output window, operand 0, single buffered']
    #allocation17 [shape = 'u8[8192]{0}', space=vmem, size = 0x2000, scoped, tag = 'output window, operand 1, single buffered']
    #allocation18 [shape = 's32[1]{0}', space=sflag, size = 0x4, scoped, tag = 'scoped memory for tpu_custom_call.1']
    #allocation19 [shape = 'u8[8192]{0}', space=vmem, size = 0x2000, scoped, tag = 'output window, operand 2, single buffered']
    %22 = vsyncpa [#allocation8], 0
    %23 = vsyncpa [#allocation11], 0
    %24 = vsyncpa [#allocation14], 0
    %25 = vsyncpa [#allocation9], 0
    %26 = vsyncpa [#allocation18], 0
    // Predicated region
    $region2: #{tpu_custom_call.1} parent=1 // pred_check
      _
    $region3: #{tpu_custom_call.1} parent=1 // pred_check_branch
      %28 = sbr.rel (0) target = $region5
    $region4: #{tpu_custom_call.1} parent=1 // pred_region
      %s30 = ssub.s32 256, 256
      %31 = vsyncadd [#allocation8], %s30
      %s32 = sshll.u32 [#allocation7], 4
      %s33 = int_to_ptr.vmem [resolvable:$true] %s32
      %38 = dma.hbm_to_vmem [thread:$0]  %s2, 256, %s33, [#allocation8], 128, 128, 8
    $region5: #{tpu_custom_call.1} parent=1 // pred_fallthru
      _
    // Predicated region
    $region6: #{tpu_custom_call.1} parent=1 // pred_check
      _
    $region7: #{tpu_custom_call.1} parent=1 // pred_check_branch
      %40 = sbr.rel (0) target = $region9
    $region8: #{tpu_custom_call.1} parent=1 // pred_region
      %s42 = ssub.s32 256, 256
      %43 = vsyncadd [#allocation11], %s42
      %s44 = sshll.u32 [#allocation10], 4
      %s45 = int_to_ptr.vmem [resolvable:$true] %s44
      %50 = dma.hbm_to_vmem [thread:$0]  %s3, 256, %s45, [#allocation11], 128, 128, 8
    $region9: #{tpu_custom_call.1} parent=1 // pred_fallthru
      _
    // Predicated region
    $region10: #{tpu_custom_call.1} parent=1 // pred_check
      _
    $region11: #{tpu_custom_call.1} parent=1 // pred_check_branch
      %52 = sbr.rel (0) target = $region13
    $region12: #{tpu_custom_call.1} parent=1 // pred_region
      %s54 = ssub.s32 8192, 8192
      %55 = vsyncadd [#allocation11], %s54
      %s56 = sshll.u32 [#allocation12], 4
      %s57 = int_to_ptr.vmem [resolvable:$true] %s56
      %62 = dma.hbm_to_vmem [thread:$0]  %s4, 8192, %s57, [#allocation11], 256, 256, 16
    $region13: #{tpu_custom_call.1} parent=1 // pred_fallthru
      _
    // Predicated region
    $region14: #{tpu_custom_call.1} parent=1 // pred_check
      _
    $region15: #{tpu_custom_call.1} parent=1 // pred_check_branch
      %64 = sbr.rel (0) target = $region17
    $region16: #{tpu_custom_call.1} parent=1 // pred_region
      %s66 = ssub.s32 8192, 8192
      %67 = vsyncadd [#allocation14], %s66
      %s68 = sshll.u32 [#allocation13], 4
      %s69 = int_to_ptr.vmem [resolvable:$true] %s68
      %74 = dma.hbm_to_vmem [thread:$0]  %s5, 8192, %s69, [#allocation14], 256, 256, 16
    $region17: #{tpu_custom_call.1} parent=1 // pred_fallthru
      _
    // Predicated region
    $region18: #{tpu_custom_call.1} parent=1 // pred_check
      _
    $region19: #{tpu_custom_call.1} parent=1 // pred_check_branch
      %76 = sbr.rel (0) target = $region21
    $region20: #{tpu_custom_call.1} parent=1 // pred_region
      _
    $region21: #{tpu_custom_call.1} parent=1 // pred_fallthru
      _
    // Predicated region
    $region22: #{tpu_custom_call.1} parent=1 // pred_check
      _
    $region23: #{tpu_custom_call.1} parent=1 // pred_check_branch
      %78 = sbr.rel (0) target = $region25
    $region24: #{tpu_custom_call.1} parent=1 // pred_region
      _
    $region25: #{tpu_custom_call.1} parent=1 // pred_fallthru
      _
    // Predicated region
    $region26: #{tpu_custom_call.1} parent=1 // pred_check
      _
    $region27: #{tpu_custom_call.1} parent=1 // pred_check_branch
      %80 = sbr.rel (0) target = $region29
    $region28: #{tpu_custom_call.1} parent=1 // pred_region
      %s82 = ssub.s32 1024, 1024
      %83 = vsyncadd [#allocation14], %s82
      %s84 = sshll.u32 [#allocation15], 4
      %s85 = int_to_ptr.vmem [resolvable:$true] %s84
      %90 = dma.hbm_to_vmem [thread:$0]  %s8, 1024, %s85, [#allocation14], 64, 64, 4
    $region29: #{tpu_custom_call.1} parent=1 // pred_fallthru
      _
    // Predicated region
    $region30: #{tpu_custom_call.1} parent=1 // pred_check
      _
    $region31: #{tpu_custom_call.1} parent=1 // pred_check_branch
      %92 = sbr.rel (0) target = $region33
    $region32: #{tpu_custom_call.1} parent=1 // pred_region
      _
    $region33: #{tpu_custom_call.1} parent=1 // pred_fallthru
      _
    // Predicated region
    $region34: #{tpu_custom_call.1} parent=1 // pred_check
      _
    $region35: #{tpu_custom_call.1} parent=1 // pred_check_branch
      %94 = sbr.rel (0) target = $region37
    $region36: #{tpu_custom_call.1} parent=1 // pred_region
      %95 = dma.done [#allocation8], 256
    $region37: #{tpu_custom_call.1} parent=1 // pred_fallthru
      _
    // Predicated region
    $region38: #{tpu_custom_call.1} parent=1 // pred_check
      _
    $region39: #{tpu_custom_call.1} parent=1 // pred_check_branch
      %97 = sbr.rel (0) target = $region41
    $region40: #{tpu_custom_call.1} parent=1 // pred_region
      %98 = dma.done [#allocation11], 256
    $region41: #{tpu_custom_call.1} parent=1 // pred_fallthru
      _
    // Predicated region
    $region42: #{tpu_custom_call.1} parent=1 // pred_check
      _
    $region43: #{tpu_custom_call.1} parent=1 // pred_check_branch
      %100 = sbr.rel (0) target = $region45
    $region44: #{tpu_custom_call.1} parent=1 // pred_region
      %101 = dma.done [#allocation11], 8192
    $region45: #{tpu_custom_call.1} parent=1 // pred_fallthru
      _
    // Predicated region
    $region46: #{tpu_custom_call.1} parent=1 // pred_check
      _
    $region47: #{tpu_custom_call.1} parent=1 // pred_check_branch
      %103 = sbr.rel (0) target = $region49
    $region48: #{tpu_custom_call.1} parent=1 // pred_region
      %104 = dma.done [#allocation14], 8192
    $region49: #{tpu_custom_call.1} parent=1 // pred_fallthru
      _
    // Predicated region
    $region50: #{tpu_custom_call.1} parent=1 // pred_check
      _
    $region51: #{tpu_custom_call.1} parent=1 // pred_check_branch
      %106 = sbr.rel (0) target = $region53
    $region52: #{tpu_custom_call.1} parent=1 // pred_region
      %107 = dma.done [#allocation14], 1024
    $region53: #{tpu_custom_call.1} parent=1 // pred_fallthru
      _
    %p109 = scmp.eq.s32.totalorder 0, 0
    // Predicated region
    $region54: #{tpu_custom_call.1} parent=1 // pred_check
      %p110 = pneg %p109
    $region55: #{tpu_custom_call.1} parent=1 // pred_check_branch
      %112 = sbr.rel (%p110) target = $region57
    $region56: #{tpu_custom_call.1} parent=1 // pred_region
      %s113 = sld [smem:[#allocation6]]
      %s114 = smul.addr %s113, 16
      %s115 = scalar_lea.hbm %s1, %s114
      // Predicated region
      $region58: #{tpu_custom_call.1} parent=56 // pred_check
        _
      $region59: #{tpu_custom_call.1} parent=56 // pred_check_branch
        %117 = sbr.rel target = $region61
      $region60: #{tpu_custom_call.1} parent=56 // pred_region
        %118 = sst [smem:[#allocation22]] [#allocation21]
        %119 = sst [smem:[#allocation23]] [#allocation20]
      $region61: #{tpu_custom_call.1} parent=56 // pred_fallthru
        _
      %121 = shalt.err (0)
      %s123 = sshll.u32 [#allocation2], 4
      %s124 = int_to_ptr.vmem [resolvable:$true] %s123
      %126 = dma.hbm_to_vmem [thread:$0]  %s115, 16, %s124, [#allocation4]
      %s127 = sld [smem:[#allocation6 + $0x1]]
      %s128 = smul.addr %s127, 16
      %s129 = scalar_lea.hbm %s1, %s128
      %s130 = scalar_lea.vmem [#allocation2], 1
      %s131 = scalar_lea.sflag [#allocation4], 1
      // Predicated region
      $region62: #{tpu_custom_call.1} parent=56 // pred_check
        _
      $region63: #{tpu_custom_call.1} parent=56 // pred_check_branch
        %133 = sbr.rel target = $region65
      $region64: #{tpu_custom_call.1} parent=56 // pred_region
        %134 = sst [smem:[#allocation22]] [#allocation25]
        %135 = sst [smem:[#allocation23]] [#allocation24]
      $region65: #{tpu_custom_call.1} parent=56 // pred_fallthru
        _
      %137 = shalt.err (0)
      %s139 = sshll.u32 %s130, 4
      %s140 = int_to_ptr.vmem [resolvable:$true] %s139
      %142 = dma.hbm_to_vmem [thread:$0]  %s129, 16, %s140, %s131
      %s143 = sld [smem:[#allocation6 + $0x2]]
      %s144 = smul.addr %s143, 16
      %s145 = scalar_lea.hbm %s1, %s144
      %s146 = scalar_lea.vmem [#allocation2], 2
      %s147 = scalar_lea.sflag [#allocation4], 2
      // Predicated region
      $region66: #{tpu_custom_call.1} parent=56 // pred_check
        _
      $region67: #{tpu_custom_call.1} parent=56 // pred_check_branch
        %149 = sbr.rel target = $region69
      $region68: #{tpu_custom_call.1} parent=56 // pred_region
        %150 = sst [smem:[#allocation22]] [#allocation27]
        %151 = sst [smem:[#allocation23]] [#allocation26]
      $region69: #{tpu_custom_call.1} parent=56 // pred_fallthru
        _
      %153 = shalt.err (0)
      %s155 = sshll.u32 %s146, 4
      %s156 = int_to_ptr.vmem [resolvable:$true] %s155
      %158 = dma.hbm_to_vmem [thread:$0]  %s145, 16, %s156, %s147
      %s159 = sld [smem:[#allocation6 + $0x3]]
      %s160 = smul.addr %s159, 16
      %s161 = scalar_lea.hbm %s1, %s160
      %s162 = scalar_lea.vmem [#allocation2], 3
      %s163 = scalar_lea.sflag [#allocation4], 3
      // Predicated region
      $region70: #{tpu_custom_call.1} parent=56 // pred_check
        _
      $region71: #{tpu_custom_call.1} parent=56 // pred_check_branch
        %165 = sbr.rel target = $region73
      $region72: #{tpu_custom_call.1} parent=56 // pred_region
        %166 = sst [smem:[#allocation22]] [#allocation29]
        %167 = sst [smem:[#allocation23]] [#allocation28]
      $region73: #{tpu_custom_call.1} parent=56 // pred_fallthru
        _
      %169 = shalt.err (0)
      %s171 = sshll.u32 %s162, 4
      %s172 = int_to_ptr.vmem [resolvable:$true] %s171
      %174 = dma.hbm_to_vmem [thread:$0]  %s161, 16, %s172, %s163
      %s175 = sld [smem:[#allocation6 + $0x4]]
      %s176 = smul.addr %s175, 16
      %s177 = scalar_lea.hbm %s1, %s176
      %s178 = scalar_lea.vmem [#allocation2], 4
      %s179 = scalar_lea.sflag [#allocation4], 4
      // Predicated region
      $region74: #{tpu_custom_call.1} parent=56 // pred_check
        _
      $region75: #{tpu_custom_call.1} parent=56 // pred_check_branch
        %181 = sbr.rel target = $region77
      $region76: #{tpu_custom_call.1} parent=56 // pred_region
        %182 = sst [smem:[#allocation22]] [#allocation31]
        %183 = sst [smem:[#allocation23]] [#allocation30]
      $region77: #{tpu_custom_call.1} parent=56 // pred_fallthru
        _
      %185 = shalt.err (0)
      %s187 = sshll.u32 %s178, 4
      %s188 = int_to_ptr.vmem [resolvable:$true] %s187
      %190 = dma.hbm_to_vmem [thread:$0]  %s177, 16, %s188, %s179
      %s191 = sld [smem:[#allocation6 + $0x5]]
      %s192 = smul.addr %s191, 16
      %s193 = scalar_lea.hbm %s1, %s192
      %s194 = scalar_lea.vmem [#allocation2], 5
      %s195 = scalar_lea.sflag [#allocation4], 5
      // Predicated region
      $region78: #{tpu_custom_call.1} parent=56 // pred_check
        _
      $region79: #{tpu_custom_call.1} parent=56 // pred_check_branch
        %197 = sbr.rel target = $region81
      $region80: #{tpu_custom_call.1} parent=56 // pred_region
        %198 = sst [smem:[#allocation22]] [#allocation33]
        %199 = sst [smem:[#allocation23]] [#allocation32]
      $region81: #{tpu_custom_call.1} parent=56 // pred_fallthru
        _
      %201 = shalt.err (0)
      %s203 = sshll.u32 %s194, 4
      %s204 = int_to_ptr.vmem [resolvable:$true] %s203
      %206 = dma.hbm_to_vmem [thread:$0]  %s193, 16, %s204, %s195
      %s207 = sld [smem:[#allocation6 + $0x6]]
      %s208 = smul.addr %s207, 16
      %s209 = scalar_lea.hbm %s1, %s208
      %s210 = scalar_lea.vmem [#allocation2], 6
      %s211 = scalar_lea.sflag [#allocation4], 6
      // Predicated region
      $region82: #{tpu_custom_call.1} parent=56 // pred_check
        _
      $region83: #{tpu_custom_call.1} parent=56 // pred_check_branch
        %213 = sbr.rel target = $region85
      $region84: #{tpu_custom_call.1} parent=56 // pred_region
        %214 = sst [smem:[#allocation22]] [#allocation35]
        %215 = sst [smem:[#allocation23]] [#allocation34]
      $region85: #{tpu_custom_call.1} parent=56 // pred_fallthru
        _
      %217 = shalt.err (0)
      %s219 = sshll.u32 %s210, 4
      %s220 = int_to_ptr.vmem [resolvable:$true] %s219
      %222 = dma.hbm_to_vmem [thread:$0]  %s209, 16, %s220, %s211
      %s223 = sld [smem:[#allocation6 + $0x7]]
      %s224 = smul.addr %s223, 16
      %s225 = scalar_lea.hbm %s1, %s224
      %s226 = scalar_lea.vmem [#allocation2], 7
      %s227 = scalar_lea.sflag [#allocation4], 7
      // Predicated region
      $region86: #{tpu_custom_call.1} parent=56 // pred_check
        _
      $region87: #{tpu_custom_call.1} parent=56 // pred_check_branch
        %229 = sbr.rel target = $region89
      $region88: #{tpu_custom_call.1} parent=56 // pred_region
        %230 = sst [smem:[#allocation22]] [#allocation37]
        %231 = sst [smem:[#allocation23]] [#allocation36]
      $region89: #{tpu_custom_call.1} parent=56 // pred_fallthru
        _
      %233 = shalt.err (0)
      %s235 = sshll.u32 %s226, 4
      %s236 = int_to_ptr.vmem [resolvable:$true] %s235
      %238 = dma.hbm_to_vmem [thread:$0]  %s225, 16, %s236, %s227
      %240 = dma.done [#allocation4], 16
      %242 = dma.done %s131, 16
      %244 = dma.done %s147, 16
      %246 = dma.done %s163, 16
      %248 = dma.done %s179, 16
      %250 = dma.done %s195, 16
      %252 = dma.done %s211, 16
      %254 = dma.done %s227, 16
      %v255 = vld [vmem:[#allocation2] sm:$0xff]
      %v256 = vpack.c.bf16 %v255, %v255
      %v257 = vld [vmem:[#allocation7] sm:$0xff]
      %v258 = vld [vmem:[#allocation10] sm:$0xff]
      %v259 = vpack.c.bf16 %v257, %v257
      %v260 = vld [vmem:[#allocation12] sm:$0xff]
      %v261 = vld [vmem:[#allocation12 + $0x8] sm:$0xff]
      %v262 = vld [vmem:[#allocation12 + $0x10] sm:$0xff]
      %v263 = vld [vmem:[#allocation12 + $0x18] sm:$0xff]
      %v264 = vld [vmem:[#allocation12 + $0x20] sm:$0xff]
      %v265 = vld [vmem:[#allocation12 + $0x28] sm:$0xff]
      %v266 = vld [vmem:[#allocation12 + $0x30] sm:$0xff]
      %v267 = vld [vmem:[#allocation12 + $0x38] sm:$0xff]
      %v268 = vld [vmem:[#allocation12 + $0x40] sm:$0xff]
      %v269 = vld [vmem:[#allocation12 + $0x48] sm:$0xff]
      %v270 = vld [vmem:[#allocation12 + $0x50] sm:$0xff]
      %v271 = vld [vmem:[#allocation12 + $0x58] sm:$0xff]
      %v272 = vld [vmem:[#allocation12 + $0x60] sm:$0xff]
      %v273 = vld [vmem:[#allocation12 + $0x68] sm:$0xff]
      %v274 = vld [vmem:[#allocation12 + $0x70] sm:$0xff]
      %v275 = vld [vmem:[#allocation12 + $0x78] sm:$0xff]
      %v276 = vld [vmem:[#allocation12 + $0x80] sm:$0xff]
      %v277 = vld [vmem:[#allocation12 + $0x88] sm:$0xff]
      %v278 = vld [vmem:[#allocation12 + $0x90] sm:$0xff]
      %v279 = vld [vmem:[#allocation12 + $0x98] sm:$0xff]
      %v280 = vld [vmem:[#allocation12 + $0xa0] sm:$0xff]
      %v281 = vld [vmem:[#allocation12 + $0xa8] sm:$0xff]
      %v282 = vld [vmem:[#allocation12 + $0xb0] sm:$0xff]
      %v283 = vld [vmem:[#allocation12 + $0xb8] sm:$0xff]
      %v284 = vld [vmem:[#allocation12 + $0xc0] sm:$0xff]
      %v285 = vld [vmem:[#allocation12 + $0xc8] sm:$0xff]
      %v286 = vld [vmem:[#allocation12 + $0xd0] sm:$0xff]
      %v287 = vld [vmem:[#allocation12 + $0xd8] sm:$0xff]
      %v288 = vld [vmem:[#allocation12 + $0xe0] sm:$0xff]
      %v289 = vld [vmem:[#allocation12 + $0xe8] sm:$0xff]
      %v290 = vld [vmem:[#allocation12 + $0xf0] sm:$0xff]
      %v291 = vld [vmem:[#allocation12 + $0xf8] sm:$0xff]
      %v292 = vld [vmem:[#allocation12 + $0x100] sm:$0xff]
      %v293 = vld [vmem:[#allocation12 + $0x108] sm:$0xff]
      %v294 = vld [vmem:[#allocation12 + $0x110] sm:$0xff]
      %v295 = vld [vmem:[#allocation12 + $0x118] sm:$0xff]
      %v296 = vld [vmem:[#allocation12 + $0x120] sm:$0xff]
      %v297 = vld [vmem:[#allocation12 + $0x128] sm:$0xff]
      %v298 = vld [vmem:[#allocation12 + $0x130] sm:$0xff]
      %v299 = vld [vmem:[#allocation12 + $0x138] sm:$0xff]
      %v300 = vld [vmem:[#allocation12 + $0x140] sm:$0xff]
      %v301 = vld [vmem:[#allocation12 + $0x148] sm:$0xff]
      %v302 = vld [vmem:[#allocation12 + $0x150] sm:$0xff]
      %v303 = vld [vmem:[#allocation12 + $0x158] sm:$0xff]
      %v304 = vld [vmem:[#allocation12 + $0x160] sm:$0xff]
      %v305 = vld [vmem:[#allocation12 + $0x168] sm:$0xff]
      %v306 = vld [vmem:[#allocation12 + $0x170] sm:$0xff]
      %v307 = vld [vmem:[#allocation12 + $0x178] sm:$0xff]
      %v308 = vld [vmem:[#allocation12 + $0x180] sm:$0xff]
      %v309 = vld [vmem:[#allocation12 + $0x188] sm:$0xff]
      %v310 = vld [vmem:[#allocation12 + $0x190] sm:$0xff]
      %v311 = vld [vmem:[#allocation12 + $0x198] sm:$0xff]
      %v312 = vld [vmem:[#allocation12 + $0x1a0] sm:$0xff]
      %v313 = vld [vmem:[#allocation12 + $0x1a8] sm:$0xff]
      %v314 = vld [vmem:[#allocation12 + $0x1b0] sm:$0xff]
      %v315 = vld [vmem:[#allocation12 + $0x1b8] sm:$0xff]
      %v316 = vld [vmem:[#allocation12 + $0x1c0] sm:$0xff]
      %v317 = vld [vmem:[#allocation12 + $0x1c8] sm:$0xff]
      %v318 = vld [vmem:[#allocation12 + $0x1d0] sm:$0xff]
      %v319 = vld [vmem:[#allocation12 + $0x1d8] sm:$0xff]
      %v320 = vld [vmem:[#allocation12 + $0x1e0] sm:$0xff]
      %v321 = vld [vmem:[#allocation12 + $0x1e8] sm:$0xff]
      %v322 = vld [vmem:[#allocation12 + $0x1f0] sm:$0xff]
      %v323 = vld [vmem:[#allocation12 + $0x1f8] sm:$0xff]
      %v324 = vld [vmem:[%s6] sm:$0xf]
      %v326 = vlaneseq
      %v327 = vshrl.u32 %v326, 7
      %v328 = vsub.s32 0, %v327
      %v329 = vrot.slane %v324, %v328
      %v330 = vlaneseq
      %v331 = vshrl.u32 %v330, 7
      %v332 = vsub.s32 1, %v331
      %v333 = vrot.slane %v324, %v332
      %v334 = vlaneseq
      %v335 = vshrl.u32 %v334, 7
      %v336 = vsub.s32 2, %v335
      %v337 = vrot.slane %v324, %v336
      %v338 = vlaneseq
      %v339 = vshrl.u32 %v338, 7
      %v340 = vsub.s32 3, %v339
      %v341 = vrot.slane %v324, %v340
      %v410 = vunpack.c.l.b16 %v260
      %v411 = vunpack.c.h.b16 %v260
      %v412 = vunpack.c.l.b16 %v261
      %v413 = vunpack.c.h.b16 %v261
      %v414 = vunpack.c.l.b16 %v262
      %v415 = vunpack.c.h.b16 %v262
      %v416 = vunpack.c.l.b16 %v263
      %v417 = vunpack.c.h.b16 %v263
      %v418 = vunpack.c.l.b16 %v264
      %v419 = vunpack.c.h.b16 %v264
      %v420 = vunpack.c.l.b16 %v265
      %v421 = vunpack.c.h.b16 %v265
      %v422 = vunpack.c.l.b16 %v266
      %v423 = vunpack.c.h.b16 %v266
      %v424 = vunpack.c.l.b16 %v267
      %v425 = vunpack.c.h.b16 %v267
      %v426 = vunpack.c.l.b16 %v268
      %v427 = vunpack.c.h.b16 %v268
      %v428 = vunpack.c.l.b16 %v269
      %v429 = vunpack.c.h.b16 %v269
      %v430 = vunpack.c.l.b16 %v270
      %v431 = vunpack.c.h.b16 %v270
      %v432 = vunpack.c.l.b16 %v271
      %v433 = vunpack.c.h.b16 %v271
      %v434 = vunpack.c.l.b16 %v272
      %v435 = vunpack.c.h.b16 %v272
      %v436 = vunpack.c.l.b16 %v273
      %v437 = vunpack.c.h.b16 %v273
      %v438 = vunpack.c.l.b16 %v274
      %v439 = vunpack.c.h.b16 %v274
      %v440 = vunpack.c.l.b16 %v275
      %v441 = vunpack.c.h.b16 %v275
      %v442 = vunpack.c.l.b16 %v276
      %v443 = vunpack.c.h.b16 %v276
      %v444 = vunpack.c.l.b16 %v277
      %v445 = vunpack.c.h.b16 %v277
      %v446 = vunpack.c.l.b16 %v278
      %v447 = vunpack.c.h.b16 %v278
      %v448 = vunpack.c.l.b16 %v279
      %v449 = vunpack.c.h.b16 %v279
      %v450 = vunpack.c.l.b16 %v280
      %v451 = vunpack.c.h.b16 %v280
      %v452 = vunpack.c.l.b16 %v281
      %v453 = vunpack.c.h.b16 %v281
      %v454 = vunpack.c.l.b16 %v282
      %v455 = vunpack.c.h.b16 %v282
      %v456 = vunpack.c.l.b16 %v283
      %v457 = vunpack.c.h.b16 %v283
      %v458 = vunpack.c.l.b16 %v284
      %v459 = vunpack.c.h.b16 %v284
      %v460 = vunpack.c.l.b16 %v285
      %v461 = vunpack.c.h.b16 %v285
      %v462 = vunpack.c.l.b16 %v286
      %v463 = vunpack.c.h.b16 %v286
      %v464 = vunpack.c.l.b16 %v287
      %v465 = vunpack.c.h.b16 %v287
      %v466 = vunpack.c.l.b16 %v288
      %v467 = vunpack.c.h.b16 %v288
      %v468 = vunpack.c.l.b16 %v289
      %v469 = vunpack.c.h.b16 %v289
      %v470 = vunpack.c.l.b16 %v290
      %v471 = vunpack.c.h.b16 %v290
      %v472 = vunpack.c.l.b16 %v291
      %v473 = vunpack.c.h.b16 %v291
      %v474 = vunpack.c.l.b16 %v292
      %v475 = vunpack.c.h.b16 %v292
      %v476 = vunpack.c.l.b16 %v293
      %v477 = vunpack.c.h.b16 %v293
      %v478 = vunpack.c.l.b16 %v294
      %v479 = vunpack.c.h.b16 %v294
      %v480 = vunpack.c.l.b16 %v295
      %v481 = vunpack.c.h.b16 %v295
      %v482 = vunpack.c.l.b16 %v296
      %v483 = vunpack.c.h.b16 %v296
      %v484 = vunpack.c.l.b16 %v297
      %v485 = vunpack.c.h.b16 %v297
      %v486 = vunpack.c.l.b16 %v298
      %v487 = vunpack.c.h.b16 %v298
      %v488 = vunpack.c.l.b16 %v299
      %v489 = vunpack.c.h.b16 %v299
      %v490 = vunpack.c.l.b16 %v300
      %v491 = vunpack.c.h.b16 %v300
      %v492 = vunpack.c.l.b16 %v301
      %v493 = vunpack.c.h.b16 %v301
      %v494 = vunpack.c.l.b16 %v302
      %v495 = vunpack.c.h.b16 %v302
      %v496 = vunpack.c.l.b16 %v303
      %v497 = vunpack.c.h.b16 %v303
      %v498 = vunpack.c.l.b16 %v304
      %v499 = vunpack.c.h.b16 %v304
      %v500 = vunpack.c.l.b16 %v305
      %v501 = vunpack.c.h.b16 %v305
      %v502 = vunpack.c.l.b16 %v306
      %v503 = vunpack.c.h.b16 %v306
      %v504 = vunpack.c.l.b16 %v307
      %v505 = vunpack.c.h.b16 %v307
      %v506 = vunpack.c.l.b16 %v308
      %v507 = vunpack.c.h.b16 %v308
      %v508 = vunpack.c.l.b16 %v309
      %v509 = vunpack.c.h.b16 %v309
      %v510 = vunpack.c.l.b16 %v310
      %v511 = vunpack.c.h.b16 %v310
      %v512 = vunpack.c.l.b16 %v311
      %v513 = vunpack.c.h.b16 %v311
      %v514 = vunpack.c.l.b16 %v312
      %v515 = vunpack.c.h.b16 %v312
      %v516 = vunpack.c.l.b16 %v313
      %v517 = vunpack.c.h.b16 %v313
      %v518 = vunpack.c.l.b16 %v314
      %v519 = vunpack.c.h.b16 %v314
      %v520 = vunpack.c.l.b16 %v315
      %v521 = vunpack.c.h.b16 %v315
      %v522 = vunpack.c.l.b16 %v316
      %v523 = vunpack.c.h.b16 %v316
      %v524 = vunpack.c.l.b16 %v317
      %v525 = vunpack.c.h.b16 %v317
      %v526 = vunpack.c.l.b16 %v318
      %v527 = vunpack.c.h.b16 %v318
      %v528 = vunpack.c.l.b16 %v319
      %v529 = vunpack.c.h.b16 %v319
      %v530 = vunpack.c.l.b16 %v320
      %v531 = vunpack.c.h.b16 %v320
      %v532 = vunpack.c.l.b16 %v321
      %v533 = vunpack.c.h.b16 %v321
      %v534 = vunpack.c.l.b16 %v322
      %v535 = vunpack.c.h.b16 %v322
      %v536 = vunpack.c.l.b16 %v323
      %v537 = vunpack.c.h.b16 %v323
      %v538 = vpack.c.b16 %v414, %v410
      %v539 = vpack.c.b16 %v415, %v411
      %v540 = vpack.c.b16 %v416, %v412
      %v541 = vpack.c.b16 %v417, %v413
      %v542 = vpack.c.b16 %v422, %v418
      %v543 = vpack.c.b16 %v423, %v419
      %v544 = vpack.c.b16 %v424, %v420
      %v545 = vpack.c.b16 %v425, %v421
      %v546 = vpack.c.b16 %v430, %v426
      %v547 = vpack.c.b16 %v431, %v427
      %v548 = vpack.c.b16 %v432, %v428
      %v549 = vpack.c.b16 %v433, %v429
      %v550 = vpack.c.b16 %v438, %v434
      %v551 = vpack.c.b16 %v439, %v435
      %v552 = vpack.c.b16 %v440, %v436
      %v553 = vpack.c.b16 %v441, %v437
      %v554 = vpack.c.b16 %v446, %v442
      %v555 = vpack.c.b16 %v447, %v443
      %v556 = vpack.c.b16 %v448, %v444
      %v557 = vpack.c.b16 %v449, %v445
      %v558 = vpack.c.b16 %v454, %v450
      %v559 = vpack.c.b16 %v455, %v451
      %v560 = vpack.c.b16 %v456, %v452
      %v561 = vpack.c.b16 %v457, %v453
      %v562 = vpack.c.b16 %v462, %v458
      %v563 = vpack.c.b16 %v463, %v459
      %v564 = vpack.c.b16 %v464, %v460
      %v565 = vpack.c.b16 %v465, %v461
      %v566 = vpack.c.b16 %v470, %v466
      %v567 = vpack.c.b16 %v471, %v467
      %v568 = vpack.c.b16 %v472, %v468
      %v569 = vpack.c.b16 %v473, %v469
      %v570 = vpack.c.b16 %v478, %v474
      %v571 = vpack.c.b16 %v479, %v475
      %v572 = vpack.c.b16 %v480, %v476
      %v573 = vpack.c.b16 %v481, %v477
      %v574 = vpack.c.b16 %v486, %v482
      %v575 = vpack.c.b16 %v487, %v483
      %v576 = vpack.c.b16 %v488, %v484
      %v577 = vpack.c.b16 %v489, %v485
      %v578 = vpack.c.b16 %v494, %v490
      %v579 = vpack.c.b16 %v495, %v491
      %v580 = vpack.c.b16 %v496, %v492
      %v581 = vpack.c.b16 %v497, %v493
      %v582 = vpack.c.b16 %v502, %v498
      %v583 = vpack.c.b16 %v503, %v499
      %v584 = vpack.c.b16 %v504, %v500
      %v585 = vpack.c.b16 %v505, %v501
      %v586 = vpack.c.b16 %v510, %v506
      %v587 = vpack.c.b16 %v511, %v507
      %v588 = vpack.c.b16 %v512, %v508
      %v589 = vpack.c.b16 %v513, %v509
      %v590 = vpack.c.b16 %v518, %v514
      %v591 = vpack.c.b16 %v519, %v515
      %v592 = vpack.c.b16 %v520, %v516
      %v593 = vpack.c.b16 %v521, %v517
      %v594 = vpack.c.b16 %v526, %v522
      %v595 = vpack.c.b16 %v527, %v523
      %v596 = vpack.c.b16 %v528, %v524
      %v597 = vpack.c.b16 %v529, %v525
      %v598 = vpack.c.b16 %v534, %v530
      %v599 = vpack.c.b16 %v535, %v531
      %v600 = vpack.c.b16 %v536, %v532
      %v601 = vpack.c.b16 %v537, %v533
      %666 = vmatprep.subr.bf16.mxu0 %v567
      %667 = vmatpush1.bf16.msra.mxu0 %v566
      %668 = vmatprep.subr.bf16.mxu0 %v563
      %669 = vmatpush1.bf16.msra.mxu0 %v562
      %670 = vmatprep.subr.bf16.mxu0 %v559
      %671 = vmatpush1.bf16.msra.mxu0 %v558
      %672 = vmatprep.subr.bf16.mxu0 %v555
      %673 = vmatpush1.bf16.msra.mxu0 %v554
      %674 = vmatprep.subr.bf16.mxu0 %v551
      %675 = vmatpush1.bf16.msra.mxu0 %v550
      %676 = vmatprep.subr.bf16.mxu0 %v547
      %677 = vmatpush1.bf16.msra.mxu0 %v546
      %678 = vmatprep.subr.bf16.mxu0 %v543
      %679 = vmatpush1.bf16.msra.mxu0 %v542
      %680 = vmatprep.subr.bf16.mxu0 %v539
      %681 = vmatpush1.bf16.msra.mxu0 %v538
      %682 = vmatprep.subr.bf16.mxu0 %v599
      %683 = vmatpush2.bf16.msra.mxu0 %v598
      %684 = vmatprep.subr.bf16.mxu0 %v595
      %685 = vmatpush2.bf16.msra.mxu0 %v594
      %686 = vmatprep.subr.bf16.mxu0 %v591
      %687 = vmatpush2.bf16.msra.mxu0 %v590
      %688 = vmatprep.subr.bf16.mxu0 %v587
      %689 = vmatpush2.bf16.msra.mxu0 %v586
      %690 = vmatprep.subr.bf16.mxu0 %v583
      %691 = vmatpush2.bf16.msra.mxu0 %v582
      %692 = vmatprep.subr.bf16.mxu0 %v579
      %693 = vmatpush2.bf16.msra.mxu0 %v578
      %694 = vmatprep.subr.bf16.mxu0 %v575
      %695 = vmatpush2.bf16.msra.mxu0 %v574
      %696 = vmatprep.subr.bf16.mxu0 %v571
      %697 = vmatpush2.bf16.msra.mxu0 %v570
      %698 = vmatprep.mubr.bf16.mxu0 %v259
      %699 = vmatmul.mubr.bf16.gmra.mxu0 %v256
      %v700 = vpop.f32.mrf.mxu0
      %v701 = vadd.f32 %v329, %v700
      %v702 = vpop.f32.mrf.mxu0
      %v703 = vadd.f32 %v333, %v702
      %v704 = vpop.f32.mrf.mxu0
      %v705 = vpop.f32.mrf.mxu0
      %706 = vdwg.mxu0
      %707 = vmatprep.subr.bf16.mxu0 %v569
      %708 = vmatpush1.bf16.msra.mxu0 %v568
      %709 = vmatprep.subr.bf16.mxu0 %v565
      %710 = vmatpush1.bf16.msra.mxu0 %v564
      %711 = vmatprep.subr.bf16.mxu0 %v561
      %712 = vmatpush1.bf16.msra.mxu0 %v560
      %713 = vmatprep.subr.bf16.mxu0 %v557
      %714 = vmatpush1.bf16.msra.mxu0 %v556
      %715 = vmatprep.subr.bf16.mxu0 %v553
      %716 = vmatpush1.bf16.msra.mxu0 %v552
      %717 = vmatprep.subr.bf16.mxu0 %v549
      %718 = vmatpush1.bf16.msra.mxu0 %v548
      %719 = vmatprep.subr.bf16.mxu0 %v545
      %720 = vmatpush1.bf16.msra.mxu0 %v544
      %721 = vmatprep.subr.bf16.mxu0 %v541
      %722 = vmatpush1.bf16.msra.mxu0 %v540
      %723 = vmatprep.subr.bf16.mxu0 %v601
      %724 = vmatpush2.bf16.msra.mxu0 %v600
      %725 = vmatprep.subr.bf16.mxu0 %v597
      %726 = vmatpush2.bf16.msra.mxu0 %v596
      %727 = vmatprep.subr.bf16.mxu0 %v593
      %728 = vmatpush2.bf16.msra.mxu0 %v592
      %729 = vmatprep.subr.bf16.mxu0 %v589
      %730 = vmatpush2.bf16.msra.mxu0 %v588
      %731 = vmatprep.subr.bf16.mxu0 %v585
      %732 = vmatpush2.bf16.msra.mxu0 %v584
      %733 = vmatprep.subr.bf16.mxu0 %v581
      %734 = vmatpush2.bf16.msra.mxu0 %v580
      %735 = vmatprep.subr.bf16.mxu0 %v577
      %736 = vmatpush2.bf16.msra.mxu0 %v576
      %737 = vmatprep.subr.bf16.mxu0 %v573
      %738 = vmatpush2.bf16.msra.mxu0 %v572
      %739 = vmatprep.mubr.bf16.mxu0 %v259
      %740 = vmatmul.mubr.bf16.gmra.mxu0 %v256
      %v741 = vpop.f32.mrf.mxu0
      %v742 = vadd.f32 %v337, %v741
      %v743 = vpop.f32.mrf.mxu0
      %v744 = vadd.f32 %v341, %v743
      %v745 = vpop.f32.mrf.mxu0
      %v746 = vpop.f32.mrf.mxu0
      %747 = vdwg.mxu0
      %v748 = vxor.u32 %v701, 2147483648
      %v749 = vmul.f32 %v748, 1.442695
      %v750 = vpow.pop %v749
      %v751 = vadd.f32 %v750, 1.0
      %v752 = vrcp.pop %v751
      %v753 = vmul.f32 1.0, %v752
      %v754 = vxor.u32 %v703, 2147483648
      %v755 = vmul.f32 %v754, 1.442695
      %v756 = vpow.pop %v755
      %v757 = vadd.f32 %v756, 1.0
      %v758 = vrcp.pop %v757
      %v759 = vmul.f32 1.0, %v758
      %v760 = vtanh.pop %v742
      %v761 = vxor.u32 %v744, 2147483648
      %v762 = vmul.f32 %v761, 1.442695
      %v763 = vpow.pop %v762
      %v764 = vadd.f32 %v763, 1.0
      %v765 = vrcp.pop %v764
      %v766 = vmul.f32 1.0, %v765
      %v767 = vmul.f32 %v759, %v258
      %v768 = vmul.f32 %v753, %v760
      %v769 = vadd.f32 %v767, %v768
      %v770 = vtanh.pop %v769
      %v771 = vmul.f32 %v766, %v770
      %772 = vst [vmem:[#allocation17] sm:$0xff] %v771
      %773 = vst [vmem:[#allocation19] sm:$0xff] %v769
      %v774 = vpack.c.bf16 %v771, %v771
      %s775 = scalar_lea.vmem [#allocation7], 8
      %v776 = vld [vmem:[%s775] sm:$0xff]
      %s777 = scalar_lea.vmem [#allocation10], 8
      %v778 = vld [vmem:[%s777] sm:$0xff]
      %v779 = vpack.c.bf16 %v776, %v776
      %v780 = vld [vmem:[#allocation13] sm:$0xff]
      %v781 = vld [vmem:[#allocation13 + $0x8] sm:$0xff]
      %v782 = vld [vmem:[#allocation13 + $0x10] sm:$0xff]
      %v783 = vld [vmem:[#allocation13 + $0x18] sm:$0xff]
      %v784 = vld [vmem:[#allocation13 + $0x20] sm:$0xff]
      %v785 = vld [vmem:[#allocation13 + $0x28] sm:$0xff]
      %v786 = vld [vmem:[#allocation13 + $0x30] sm:$0xff]
      %v787 = vld [vmem:[#allocation13 + $0x38] sm:$0xff]
      %v788 = vld [vmem:[#allocation13 + $0x40] sm:$0xff]
      %v789 = vld [vmem:[#allocation13 + $0x48] sm:$0xff]
      %v790 = vld [vmem:[#allocation13 + $0x50] sm:$0xff]
      %v791 = vld [vmem:[#allocation13 + $0x58] sm:$0xff]
      %v792 = vld [vmem:[#allocation13 + $0x60] sm:$0xff]
      %v793 = vld [vmem:[#allocation13 + $0x68] sm:$0xff]
      %v794 = vld [vmem:[#allocation13 + $0x70] sm:$0xff]
      %v795 = vld [vmem:[#allocation13 + $0x78] sm:$0xff]
      %v796 = vld [vmem:[#allocation13 + $0x80] sm:$0xff]
      %v797 = vld [vmem:[#allocation13 + $0x88] sm:$0xff]
      %v798 = vld [vmem:[#allocation13 + $0x90] sm:$0xff]
      %v799 = vld [vmem:[#allocation13 + $0x98] sm:$0xff]
      %v800 = vld [vmem:[#allocation13 + $0xa0] sm:$0xff]
      %v801 = vld [vmem:[#allocation13 + $0xa8] sm:$0xff]
      %v802 = vld [vmem:[#allocation13 + $0xb0] sm:$0xff]
      %v803 = vld [vmem:[#allocation13 + $0xb8] sm:$0xff]
      %v804 = vld [vmem:[#allocation13 + $0xc0] sm:$0xff]
      %v805 = vld [vmem:[#allocation13 + $0xc8] sm:$0xff]
      %v806 = vld [vmem:[#allocation13 + $0xd0] sm:$0xff]
      %v807 = vld [vmem:[#allocation13 + $0xd8] sm:$0xff]
      %v808 = vld [vmem:[#allocation13 + $0xe0] sm:$0xff]
      %v809 = vld [vmem:[#allocation13 + $0xe8] sm:$0xff]
      %v810 = vld [vmem:[#allocation13 + $0xf0] sm:$0xff]
      %v811 = vld [vmem:[#allocation13 + $0xf8] sm:$0xff]
      %v812 = vld [vmem:[#allocation13 + $0x100] sm:$0xff]
      %v813 = vld [vmem:[#allocation13 + $0x108] sm:$0xff]
      %v814 = vld [vmem:[#allocation13 + $0x110] sm:$0xff]
      %v815 = vld [vmem:[#allocation13 + $0x118] sm:$0xff]
      %v816 = vld [vmem:[#allocation13 + $0x120] sm:$0xff]
      %v817 = vld [vmem:[#allocation13 + $0x128] sm:$0xff]
      %v818 = vld [vmem:[#allocation13 + $0x130] sm:$0xff]
      %v819 = vld [vmem:[#allocation13 + $0x138] sm:$0xff]
      %v820 = vld [vmem:[#allocation13 + $0x140] sm:$0xff]
      %v821 = vld [vmem:[#allocation13 + $0x148] sm:$0xff]
      %v822 = vld [vmem:[#allocation13 + $0x150] sm:$0xff]
      %v823 = vld [vmem:[#allocation13 + $0x158] sm:$0xff]
      %v824 = vld [vmem:[#allocation13 + $0x160] sm:$0xff]
      %v825 = vld [vmem:[#allocation13 + $0x168] sm:$0xff]
      %v826 = vld [vmem:[#allocation13 + $0x170] sm:$0xff]
      %v827 = vld [vmem:[#allocation13 + $0x178] sm:$0xff]
      %v828 = vld [vmem:[#allocation13 + $0x180] sm:$0xff]
      %v829 = vld [vmem:[#allocation13 + $0x188] sm:$0xff]
      %v830 = vld [vmem:[#allocation13 + $0x190] sm:$0xff]
      %v831 = vld [vmem:[#allocation13 + $0x198] sm:$0xff]
      %v832 = vld [vmem:[#allocation13 + $0x1a0] sm:$0xff]
      %v833 = vld [vmem:[#allocation13 + $0x1a8] sm:$0xff]
      %v834 = vld [vmem:[#allocation13 + $0x1b0] sm:$0xff]
      %v835 = vld [vmem:[#allocation13 + $0x1b8] sm:$0xff]
      %v836 = vld [vmem:[#allocation13 + $0x1c0] sm:$0xff]
      %v837 = vld [vmem:[#allocation13 + $0x1c8] sm:$0xff]
      %v838 = vld [vmem:[#allocation13 + $0x1d0] sm:$0xff]
      %v839 = vld [vmem:[#allocation13 + $0x1d8] sm:$0xff]
      %v840 = vld [vmem:[#allocation13 + $0x1e0] sm:$0xff]
      %v841 = vld [vmem:[#allocation13 + $0x1e8] sm:$0xff]
      %v842 = vld [vmem:[#allocation13 + $0x1f0] sm:$0xff]
      %v843 = vld [vmem:[#allocation13 + $0x1f8] sm:$0xff]
      %v844 = vld [vmem:[%s7] sm:$0xf]
      %v846 = vlaneseq
      %v847 = vshrl.u32 %v846, 7
      %v848 = vsub.s32 0, %v847
      %v849 = vrot.slane %v844, %v848
      %v850 = vlaneseq
      %v851 = vshrl.u32 %v850, 7
      %v852 = vsub.s32 1, %v851
      %v853 = vrot.slane %v844, %v852
      %v854 = vlaneseq
      %v855 = vshrl.u32 %v854, 7
      %v856 = vsub.s32 2, %v855
      %v857 = vrot.slane %v844, %v856
      %v858 = vlaneseq
      %v859 = vshrl.u32 %v858, 7
      %v860 = vsub.s32 3, %v859
      %v861 = vrot.slane %v844, %v860
      %v930 = vunpack.c.l.b16 %v780
      %v931 = vunpack.c.h.b16 %v780
      %v932 = vunpack.c.l.b16 %v781
      %v933 = vunpack.c.h.b16 %v781
      %v934 = vunpack.c.l.b16 %v782
      %v935 = vunpack.c.h.b16 %v782
      %v936 = vunpack.c.l.b16 %v783
      %v937 = vunpack.c.h.b16 %v783
      %v938 = vunpack.c.l.b16 %v784
      %v939 = vunpack.c.h.b16 %v784
      %v940 = vunpack.c.l.b16 %v785
      %v941 = vunpack.c.h.b16 %v785
      %v942 = vunpack.c.l.b16 %v786
      %v943 = vunpack.c.h.b16 %v786
      %v944 = vunpack.c.l.b16 %v787
      %v945 = vunpack.c.h.b16 %v787
      %v946 = vunpack.c.l.b16 %v788
      %v947 = vunpack.c.h.b16 %v788
      %v948 = vunpack.c.l.b16 %v789
      %v949 = vunpack.c.h.b16 %v789
      %v950 = vunpack.c.l.b16 %v790
      %v951 = vunpack.c.h.b16 %v790
      %v952 = vunpack.c.l.b16 %v791
      %v953 = vunpack.c.h.b16 %v791
      %v954 = vunpack.c.l.b16 %v792
      %v955 = vunpack.c.h.b16 %v792
      %v956 = vunpack.c.l.b16 %v793
      %v957 = vunpack.c.h.b16 %v793
      %v958 = vunpack.c.l.b16 %v794
      %v959 = vunpack.c.h.b16 %v794
      %v960 = vunpack.c.l.b16 %v795
      %v961 = vunpack.c.h.b16 %v795
      %v962 = vunpack.c.l.b16 %v796
      %v963 = vunpack.c.h.b16 %v796
      %v964 = vunpack.c.l.b16 %v797
      %v965 = vunpack.c.h.b16 %v797
      %v966 = vunpack.c.l.b16 %v798
      %v967 = vunpack.c.h.b16 %v798
      %v968 = vunpack.c.l.b16 %v799
      %v969 = vunpack.c.h.b16 %v799
      %v970 = vunpack.c.l.b16 %v800
      %v971 = vunpack.c.h.b16 %v800
      %v972 = vunpack.c.l.b16 %v801
      %v973 = vunpack.c.h.b16 %v801
      %v974 = vunpack.c.l.b16 %v802
      %v975 = vunpack.c.h.b16 %v802
      %v976 = vunpack.c.l.b16 %v803
      %v977 = vunpack.c.h.b16 %v803
      %v978 = vunpack.c.l.b16 %v804
      %v979 = vunpack.c.h.b16 %v804
      %v980 = vunpack.c.l.b16 %v805
      %v981 = vunpack.c.h.b16 %v805
      %v982 = vunpack.c.l.b16 %v806
      %v983 = vunpack.c.h.b16 %v806
      %v984 = vunpack.c.l.b16 %v807
      %v985 = vunpack.c.h.b16 %v807
      %v986 = vunpack.c.l.b16 %v808
      %v987 = vunpack.c.h.b16 %v808
      %v988 = vunpack.c.l.b16 %v809
      %v989 = vunpack.c.h.b16 %v809
      %v990 = vunpack.c.l.b16 %v810
      %v991 = vunpack.c.h.b16 %v810
      %v992 = vunpack.c.l.b16 %v811
      %v993 = vunpack.c.h.b16 %v811
      %v994 = vunpack.c.l.b16 %v812
      %v995 = vunpack.c.h.b16 %v812
      %v996 = vunpack.c.l.b16 %v813
      %v997 = vunpack.c.h.b16 %v813
      %v998 = vunpack.c.l.b16 %v814
      %v999 = vunpack.c.h.b16 %v814
      %v1000 = vunpack.c.l.b16 %v815
      %v1001 = vunpack.c.h.b16 %v815
      %v1002 = vunpack.c.l.b16 %v816
      %v1003 = vunpack.c.h.b16 %v816
      %v1004 = vunpack.c.l.b16 %v817
      %v1005 = vunpack.c.h.b16 %v817
      %v1006 = vunpack.c.l.b16 %v818
      %v1007 = vunpack.c.h.b16 %v818
      %v1008 = vunpack.c.l.b16 %v819
      %v1009 = vunpack.c.h.b16 %v819
      %v1010 = vunpack.c.l.b16 %v820
      %v1011 = vunpack.c.h.b16 %v820
      %v1012 = vunpack.c.l.b16 %v821
      %v1013 = vunpack.c.h.b16 %v821
      %v1014 = vunpack.c.l.b16 %v822
      %v1015 = vunpack.c.h.b16 %v822
      %v1016 = vunpack.c.l.b16 %v823
      %v1017 = vunpack.c.h.b16 %v823
      %v1018 = vunpack.c.l.b16 %v824
      %v1019 = vunpack.c.h.b16 %v824
      %v1020 = vunpack.c.l.b16 %v825
      %v1021 = vunpack.c.h.b16 %v825
      %v1022 = vunpack.c.l.b16 %v826
      %v1023 = vunpack.c.h.b16 %v826
      %v1024 = vunpack.c.l.b16 %v827
      %v1025 = vunpack.c.h.b16 %v827
      %v1026 = vunpack.c.l.b16 %v828
      %v1027 = vunpack.c.h.b16 %v828
      %v1028 = vunpack.c.l.b16 %v829
      %v1029 = vunpack.c.h.b16 %v829
      %v1030 = vunpack.c.l.b16 %v830
      %v1031 = vunpack.c.h.b16 %v830
      %v1032 = vunpack.c.l.b16 %v831
      %v1033 = vunpack.c.h.b16 %v831
      %v1034 = vunpack.c.l.b16 %v832
      %v1035 = vunpack.c.h.b16 %v832
      %v1036 = vunpack.c.l.b16 %v833
      %v1037 = vunpack.c.h.b16 %v833
      %v1038 = vunpack.c.l.b16 %v834
      %v1039 = vunpack.c.h.b16 %v834
      %v1040 = vunpack.c.l.b16 %v835
      %v1041 = vunpack.c.h.b16 %v835
      %v1042 = vunpack.c.l.b16 %v836
      %v1043 = vunpack.c.h.b16 %v836
      %v1044 = vunpack.c.l.b16 %v837
      %v1045 = vunpack.c.h.b16 %v837
      %v1046 = vunpack.c.l.b16 %v838
      %v1047 = vunpack.c.h.b16 %v838
      %v1048 = vunpack.c.l.b16 %v839
      %v1049 = vunpack.c.h.b16 %v839
      %v1050 = vunpack.c.l.b16 %v840
      %v1051 = vunpack.c.h.b16 %v840
      %v1052 = vunpack.c.l.b16 %v841
      %v1053 = vunpack.c.h.b16 %v841
      %v1054 = vunpack.c.l.b16 %v842
      %v1055 = vunpack.c.h.b16 %v842
      %v1056 = vunpack.c.l.b16 %v843
      %v1057 = vunpack.c.h.b16 %v843
      %v1058 = vpack.c.b16 %v934, %v930
      %v1059 = vpack.c.b16 %v935, %v931
      %v1060 = vpack.c.b16 %v936, %v932
      %v1061 = vpack.c.b16 %v937, %v933
      %v1062 = vpack.c.b16 %v942, %v938
      %v1063 = vpack.c.b16 %v943, %v939
      %v1064 = vpack.c.b16 %v944, %v940
      %v1065 = vpack.c.b16 %v945, %v941
      %v1066 = vpack.c.b16 %v950, %v946
      %v1067 = vpack.c.b16 %v951, %v947
      %v1068 = vpack.c.b16 %v952, %v948
      %v1069 = vpack.c.b16 %v953, %v949
      %v1070 = vpack.c.b16 %v958, %v954
      %v1071 = vpack.c.b16 %v959, %v955
      %v1072 = vpack.c.b16 %v960, %v956
      %v1073 = vpack.c.b16 %v961, %v957
      %v1074 = vpack.c.b16 %v966, %v962
      %v1075 = vpack.c.b16 %v967, %v963
      %v1076 = vpack.c.b16 %v968, %v964
      %v1077 = vpack.c.b16 %v969, %v965
      %v1078 = vpack.c.b16 %v974, %v970
      %v1079 = vpack.c.b16 %v975, %v971
      %v1080 = vpack.c.b16 %v976, %v972
      %v1081 = vpack.c.b16 %v977, %v973
      %v1082 = vpack.c.b16 %v982, %v978
      %v1083 = vpack.c.b16 %v983, %v979
      %v1084 = vpack.c.b16 %v984, %v980
      %v1085 = vpack.c.b16 %v985, %v981
      %v1086 = vpack.c.b16 %v990, %v986
      %v1087 = vpack.c.b16 %v991, %v987
      %v1088 = vpack.c.b16 %v992, %v988
      %v1089 = vpack.c.b16 %v993, %v989
      %v1090 = vpack.c.b16 %v998, %v994
      %v1091 = vpack.c.b16 %v999, %v995
      %v1092 = vpack.c.b16 %v1000, %v996
      %v1093 = vpack.c.b16 %v1001, %v997
      %v1094 = vpack.c.b16 %v1006, %v1002
      %v1095 = vpack.c.b16 %v1007, %v1003
      %v1096 = vpack.c.b16 %v1008, %v1004
      %v1097 = vpack.c.b16 %v1009, %v1005
      %v1098 = vpack.c.b16 %v1014, %v1010
      %v1099 = vpack.c.b16 %v1015, %v1011
      %v1100 = vpack.c.b16 %v1016, %v1012
      %v1101 = vpack.c.b16 %v1017, %v1013
      %v1102 = vpack.c.b16 %v1022, %v1018
      %v1103 = vpack.c.b16 %v1023, %v1019
      %v1104 = vpack.c.b16 %v1024, %v1020
      %v1105 = vpack.c.b16 %v1025, %v1021
      %v1106 = vpack.c.b16 %v1030, %v1026
      %v1107 = vpack.c.b16 %v1031, %v1027
      %v1108 = vpack.c.b16 %v1032, %v1028
      %v1109 = vpack.c.b16 %v1033, %v1029
      %v1110 = vpack.c.b16 %v1038, %v1034
      %v1111 = vpack.c.b16 %v1039, %v1035
      %v1112 = vpack.c.b16 %v1040, %v1036
      %v1113 = vpack.c.b16 %v1041, %v1037
      %v1114 = vpack.c.b16 %v1046, %v1042
      %v1115 = vpack.c.b16 %v1047, %v1043
      %v1116 = vpack.c.b16 %v1048, %v1044
      %v1117 = vpack.c.b16 %v1049, %v1045
      %v1118 = vpack.c.b16 %v1054, %v1050
      %v1119 = vpack.c.b16 %v1055, %v1051
      %v1120 = vpack.c.b16 %v1056, %v1052
      %v1121 = vpack.c.b16 %v1057, %v1053
      %1186 = vmatprep.subr.bf16.mxu0 %v1087
      %1187 = vmatpush1.bf16.msra.mxu0 %v1086
      %1188 = vmatprep.subr.bf16.mxu0 %v1083
      %1189 = vmatpush1.bf16.msra.mxu0 %v1082
      %1190 = vmatprep.subr.bf16.mxu0 %v1079
      %1191 = vmatpush1.bf16.msra.mxu0 %v1078
      %1192 = vmatprep.subr.bf16.mxu0 %v1075
      %1193 = vmatpush1.bf16.msra.mxu0 %v1074
      %1194 = vmatprep.subr.bf16.mxu0 %v1071
      %1195 = vmatpush1.bf16.msra.mxu0 %v1070
      %1196 = vmatprep.subr.bf16.mxu0 %v1067
      %1197 = vmatpush1.bf16.msra.mxu0 %v1066
      %1198 = vmatprep.subr.bf16.mxu0 %v1063
      %1199 = vmatpush1.bf16.msra.mxu0 %v1062
      %1200 = vmatprep.subr.bf16.mxu0 %v1059
      %1201 = vmatpush1.bf16.msra.mxu0 %v1058
      %1202 = vmatprep.subr.bf16.mxu0 %v1119
      %1203 = vmatpush2.bf16.msra.mxu0 %v1118
      %1204 = vmatprep.subr.bf16.mxu0 %v1115
      %1205 = vmatpush2.bf16.msra.mxu0 %v1114
      %1206 = vmatprep.subr.bf16.mxu0 %v1111
      %1207 = vmatpush2.bf16.msra.mxu0 %v1110
      %1208 = vmatprep.subr.bf16.mxu0 %v1107
      %1209 = vmatpush2.bf16.msra.mxu0 %v1106
      %1210 = vmatprep.subr.bf16.mxu0 %v1103
      %1211 = vmatpush2.bf16.msra.mxu0 %v1102
      %1212 = vmatprep.subr.bf16.mxu0 %v1099
      %1213 = vmatpush2.bf16.msra.mxu0 %v1098
      %1214 = vmatprep.subr.bf16.mxu0 %v1095
      %1215 = vmatpush2.bf16.msra.mxu0 %v1094
      %1216 = vmatprep.subr.bf16.mxu0 %v1091
      %1217 = vmatpush2.bf16.msra.mxu0 %v1090
      %1218 = vmatprep.mubr.bf16.mxu0 %v779
      %1219 = vmatmul.mubr.bf16.gmra.mxu0 %v774
      %v1220 = vpop.f32.mrf.mxu0
      %v1221 = vadd.f32 %v849, %v1220
      %v1222 = vpop.f32.mrf.mxu0
      %v1223 = vadd.f32 %v853, %v1222
      %v1224 = vpop.f32.mrf.mxu0
      %v1225 = vpop.f32.mrf.mxu0
      %1226 = vdwg.mxu0
      %1227 = vmatprep.subr.bf16.mxu0 %v1089
      %1228 = vmatpush1.bf16.msra.mxu0 %v1088
      %1229 = vmatprep.subr.bf16.mxu0 %v1085
      %1230 = vmatpush1.bf16.msra.mxu0 %v1084
      %1231 = vmatprep.subr.bf16.mxu0 %v1081
      %1232 = vmatpush1.bf16.msra.mxu0 %v1080
      %1233 = vmatprep.subr.bf16.mxu0 %v1077
      %1234 = vmatpush1.bf16.msra.mxu0 %v1076
      %1235 = vmatprep.subr.bf16.mxu0 %v1073
      %1236 = vmatpush1.bf16.msra.mxu0 %v1072
      %1237 = vmatprep.subr.bf16.mxu0 %v1069
      %1238 = vmatpush1.bf16.msra.mxu0 %v1068
      %1239 = vmatprep.subr.bf16.mxu0 %v1065
      %1240 = vmatpush1.bf16.msra.mxu0 %v1064
      %1241 = vmatprep.subr.bf16.mxu0 %v1061
      %1242 = vmatpush1.bf16.msra.mxu0 %v1060
      %1243 = vmatprep.subr.bf16.mxu0 %v1121
      %1244 = vmatpush2.bf16.msra.mxu0 %v1120
      %1245 = vmatprep.subr.bf16.mxu0 %v1117
      %1246 = vmatpush2.bf16.msra.mxu0 %v1116
      %1247 = vmatprep.subr.bf16.mxu0 %v1113
      %1248 = vmatpush2.bf16.msra.mxu0 %v1112
      %1249 = vmatprep.subr.bf16.mxu0 %v1109
      %1250 = vmatpush2.bf16.msra.mxu0 %v1108
      %1251 = vmatprep.subr.bf16.mxu0 %v1105
      %1252 = vmatpush2.bf16.msra.mxu0 %v1104
      %1253 = vmatprep.subr.bf16.mxu0 %v1101
      %1254 = vmatpush2.bf16.msra.mxu0 %v1100
      %1255 = vmatprep.subr.bf16.mxu0 %v1097
      %1256 = vmatpush2.bf16.msra.mxu0 %v1096
      %1257 = vmatprep.subr.bf16.mxu0 %v1093
      %1258 = vmatpush2.bf16.msra.mxu0 %v1092
      %1259 = vmatprep.mubr.bf16.mxu0 %v779
      %1260 = vmatmul.mubr.bf16.gmra.mxu0 %v774
      %v1261 = vpop.f32.mrf.mxu0
      %v1262 = vadd.f32 %v857, %v1261
      %v1263 = vpop.f32.mrf.mxu0
      %v1264 = vadd.f32 %v861, %v1263
      %v1265 = vpop.f32.mrf.mxu0
      %v1266 = vpop.f32.mrf.mxu0
      %1267 = vdwg.mxu0
      %v1268 = vxor.u32 %v1221, 2147483648
      %v1269 = vmul.f32 %v1268, 1.442695
      %v1270 = vpow.pop %v1269
      %v1271 = vadd.f32 %v1270, 1.0
      %v1272 = vrcp.pop %v1271
      %v1273 = vmul.f32 1.0, %v1272
      %v1274 = vxor.u32 %v1223, 2147483648
      %v1275 = vmul.f32 %v1274, 1.442695
      %v1276 = vpow.pop %v1275
      %v1277 = vadd.f32 %v1276, 1.0
      %v1278 = vrcp.pop %v1277
      %v1279 = vmul.f32 1.0, %v1278
      %v1280 = vtanh.pop %v1262
      %v1281 = vxor.u32 %v1264, 2147483648
      %v1282 = vmul.f32 %v1281, 1.442695
      %v1283 = vpow.pop %v1282
      %v1284 = vadd.f32 %v1283, 1.0
      %v1285 = vrcp.pop %v1284
      %v1286 = vmul.f32 1.0, %v1285
      %v1287 = vmul.f32 %v1279, %v778
      %v1288 = vmul.f32 %v1273, %v1280
      %v1289 = vadd.f32 %v1287, %v1288
      %v1290 = vtanh.pop %v1289
      %v1291 = vmul.f32 %v1286, %v1290
      %s1292 = scalar_lea.vmem [#allocation17], 8
      %1293 = vst [vmem:[%s1292] sm:$0xff] %v1291
      %s1294 = scalar_lea.vmem [#allocation19], 8
      %1295 = vst [vmem:[%s1294] sm:$0xff] %v1289
      %v1296 = vpack.c.bf16 %v1291, %v1291
      %1297 = vst [vmem:[#allocation3] sm:$0xf] %v1296
    $region57: #{tpu_custom_call.1} parent=1 // pred_fallthru
      _
    %v1298 = vld [vmem:[#allocation3] sm:$0xf]
    %v1299 = vld [vmem:[#allocation15] sm:$0xf]
    %v1300 = vld [vmem:[#allocation15 + $0x4] sm:$0xf]
    %v1301 = vld [vmem:[#allocation15 + $0x8] sm:$0xf]
    %v1302 = vld [vmem:[#allocation15 + $0xc] sm:$0xf]
    %v1303 = vld [vmem:[#allocation15 + $0x10] sm:$0xf]
    %v1304 = vld [vmem:[#allocation15 + $0x14] sm:$0xf]
    %v1305 = vld [vmem:[#allocation15 + $0x18] sm:$0xf]
    %v1306 = vld [vmem:[#allocation15 + $0x1c] sm:$0xf]
    %v1307 = vld [vmem:[#allocation15 + $0x20] sm:$0xf]
    %v1308 = vld [vmem:[#allocation15 + $0x24] sm:$0xf]
    %v1309 = vld [vmem:[#allocation15 + $0x28] sm:$0xf]
    %v1310 = vld [vmem:[#allocation15 + $0x2c] sm:$0xf]
    %v1311 = vld [vmem:[#allocation15 + $0x30] sm:$0xf]
    %v1312 = vld [vmem:[#allocation15 + $0x34] sm:$0xf]
    %v1313 = vld [vmem:[#allocation15 + $0x38] sm:$0xf]
    %v1314 = vld [vmem:[#allocation15 + $0x3c] sm:$0xf]
    %v1315 = vld [vmem:[%s9] sm:$0x1]
    %v1317 = vlaneseq
    %v1318 = vshrl.u32 %v1317, 7
    %v1319 = vsub.s32 0, %v1318
    %v1320 = vrot.slane %v1315, %v1319
    %v1338 = vunpack.c.l.b16 %v1299
    %v1339 = vunpack.c.l.b16 %v1300
    %v1340 = vunpack.c.l.b16 %v1301
    %v1341 = vunpack.c.l.b16 %v1302
    %v1342 = vunpack.c.l.b16 %v1303
    %v1343 = vunpack.c.l.b16 %v1304
    %v1344 = vunpack.c.l.b16 %v1305
    %v1345 = vunpack.c.l.b16 %v1306
    %v1346 = vunpack.c.l.b16 %v1307
    %v1347 = vunpack.c.l.b16 %v1308
    %v1348 = vunpack.c.l.b16 %v1309
    %v1349 = vunpack.c.l.b16 %v1310
    %v1350 = vunpack.c.l.b16 %v1311
    %v1351 = vunpack.c.l.b16 %v1312
    %v1352 = vunpack.c.l.b16 %v1313
    %v1353 = vunpack.c.l.b16 %v1314
    %v1354 = vpack.c.b16 %v1339, %v1338
    %v1355 = vpack.c.b16 %v1341, %v1340
    %v1356 = vpack.c.b16 %v1343, %v1342
    %v1357 = vpack.c.b16 %v1345, %v1344
    %v1358 = vpack.c.b16 %v1347, %v1346
    %v1359 = vpack.c.b16 %v1349, %v1348
    %v1360 = vpack.c.b16 %v1351, %v1350
    %v1361 = vpack.c.b16 %v1353, %v1352
    %1370 = vmatprep.subr.bf16.mxu0 0
    %1371 = vmatpush1.bf16.msra.mxu0 %v1361
    %1372 = vmatprep.subr.bf16.mxu0 0
    %1373 = vmatpush1.bf16.msra.mxu0 %v1360
    %1374 = vmatprep.subr.bf16.mxu0 0
    %1375 = vmatpush1.bf16.msra.mxu0 %v1359
    %1376 = vmatprep.subr.bf16.mxu0 0
    %1377 = vmatpush1.bf16.msra.mxu0 %v1358
    %1378 = vmatprep.subr.bf16.mxu0 0
    %1379 = vmatpush1.bf16.msra.mxu0 %v1357
    %1380 = vmatprep.subr.bf16.mxu0 0
    %1381 = vmatpush1.bf16.msra.mxu0 %v1356
    %1382 = vmatprep.subr.bf16.mxu0 0
    %1383 = vmatpush1.bf16.msra.mxu0 %v1355
    %1384 = vmatprep.subr.bf16.mxu0 0
    %1385 = vmatpush1.bf16.msra.mxu0 %v1354
    %1386 = vmatprep.subr.bf16.mxu0 0
    %1387 = vmatpush2.bf16.msra.mxu0 0
    %1388 = vmatprep.subr.bf16.mxu0 0
    %1389 = vmatpush2.bf16.msra.mxu0 0
    %1390 = vmatprep.subr.bf16.mxu0 0
    %1391 = vmatpush2.bf16.msra.mxu0 0
    %1392 = vmatprep.subr.bf16.mxu0 0
    %1393 = vmatpush2.bf16.msra.mxu0 0
    %1394 = vmatprep.subr.bf16.mxu0 0
    %1395 = vmatpush2.bf16.msra.mxu0 0
    %1396 = vmatprep.subr.bf16.mxu0 0
    %1397 = vmatpush2.bf16.msra.mxu0 0
    %1398 = vmatprep.subr.bf16.mxu0 0
    %1399 = vmatpush2.bf16.msra.mxu0 0
    %1400 = vmatprep.subr.bf16.mxu0 0
    %1401 = vmatpush2.bf16.msra.mxu0 0
    %1402 = vmatprep.mubr.bf16.mxu0 0
    %1403 = vmatmul.mubr.bf16.gmra.mxu0 %v1298
    %v1404 = vpop.f32.mrf.mxu0
    %v1405 = vadd.f32 %v1320, %v1404
    %v1406 = vpop.f32.mrf.mxu0
    %v1407 = vpop.f32.mrf.mxu0
    %v1408 = vpop.f32.mrf.mxu0
    %1409 = vdwg.mxu0
    %1410 = vst [vmem:[#allocation16] sm:$0xff] %v1405
    // Predicated region
    $region90: #{tpu_custom_call.1} parent=1 // pred_check
      _
    $region91: #{tpu_custom_call.1} parent=1 // pred_check_branch
      %1412 = sbr.rel (0) target = $region93
    $region92: #{tpu_custom_call.1} parent=1 // pred_region
      %s1414 = ssub.s32 128, 128
      %1415 = vsyncadd [#allocation9], %s1414
      %s1417 = sshll.u32 [#allocation16], 4
      %s1418 = int_to_ptr.vmem [resolvable:$true] %s1417
      %1420 = dma.vmem_to_hbm [thread:$0]  %s1418, 128, %s10, [#allocation9]
    $region93: #{tpu_custom_call.1} parent=1 // pred_fallthru
      _
    // Predicated region
    $region94: #{tpu_custom_call.1} parent=1 // pred_check
      _
    $region95: #{tpu_custom_call.1} parent=1 // pred_check_branch
      %1422 = sbr.rel (0) target = $region97
    $region96: #{tpu_custom_call.1} parent=1 // pred_region
      %s1424 = ssub.s32 256, 256
      %1425 = vsyncadd [#allocation18], %s1424
      %s1426 = sshll.u32 [#allocation17], 4
      %s1427 = int_to_ptr.vmem [resolvable:$true] %s1426
      %1432 = dma.vmem_to_hbm [thread:$0]  %s1427, 256, %s11, [#allocation18], 128, 128, 8
    $region97: #{tpu_custom_call.1} parent=1 // pred_fallthru
      _
    // Predicated region
    $region98: #{tpu_custom_call.1} parent=1 // pred_check
      _
    $region99: #{tpu_custom_call.1} parent=1 // pred_check_branch
      %1434 = sbr.rel (0) target = $region101
    $region100: #{tpu_custom_call.1} parent=1 // pred_region
      %s1436 = ssub.s32 256, 256
      %1437 = vsyncadd [#allocation18], %s1436
      %s1438 = sshll.u32 [#allocation19], 4
      %s1439 = int_to_ptr.vmem [resolvable:$true] %s1438
      %1444 = dma.vmem_to_hbm [thread:$0]  %s1439, 256, %s12, [#allocation18], 128, 128, 8
    $region101: #{tpu_custom_call.1} parent=1 // pred_fallthru
      _
    // Predicated region
    $region102: #{tpu_custom_call.1} parent=1 // pred_check
      _
    $region103: #{tpu_custom_call.1} parent=1 // pred_check_branch
      %1446 = sbr.rel (0) target = $region105
    $region104: #{tpu_custom_call.1} parent=1 // pred_region
      %1447 = dma.done [#allocation9], 128
    $region105: #{tpu_custom_call.1} parent=1 // pred_fallthru
      _
    // Predicated region
    $region106: #{tpu_custom_call.1} parent=1 // pred_check
      _
    $region107: #{tpu_custom_call.1} parent=1 // pred_check_branch
      %1449 = sbr.rel (0) target = $region109
    $region108: #{tpu_custom_call.1} parent=1 // pred_region
      %1450 = dma.done [#allocation18], 256
    $region109: #{tpu_custom_call.1} parent=1 // pred_fallthru
      _
    // Predicated region
    $region110: #{tpu_custom_call.1} parent=1 // pred_check
      _
    $region111: #{tpu_custom_call.1} parent=1 // pred_check_branch
      %1452 = sbr.rel (0) target = $region113
    $region112: #{tpu_custom_call.1} parent=1 // pred_region
      %1453 = dma.done [#allocation18], 256
    $region113: #{tpu_custom_call.1} parent=1 // pred_fallthru
      _
    %1454 = vsyncpa [#allocation8], 1
    %1455 = vsyncpa [#allocation11], 1
    %1456 = vsyncpa [#allocation14], 1
    %1457 = vsyncpa [#allocation9], 1
    %1458 = vsyncpa [#allocation18], 1
  %1459 = vsyncmov [#allocation4]
  %s1460 = vpop.sfrf %1459
  %p1461 = scmp.eq.s32.totalorder %s1460, 0
  %p1462 = pneg %p1461
  %1464 = shalt.err (%p1462)
  %s1465 = scalar_lea.sflag [#allocation4], 1
  %1466 = vsyncmov %s1465
  %s1467 = vpop.sfrf %1466
  %p1468 = scmp.eq.s32.totalorder %s1467, 0
  %p1469 = pneg %p1468
  %1471 = shalt.err (%p1469)
  %s1472 = scalar_lea.sflag [#allocation4], 2
  %1473 = vsyncmov %s1472
  %s1474 = vpop.sfrf %1473
  %p1475 = scmp.eq.s32.totalorder %s1474, 0
  %p1476 = pneg %p1475
  %1478 = shalt.err (%p1476)
  %s1479 = scalar_lea.sflag [#allocation4], 3
  %1480 = vsyncmov %s1479
  %s1481 = vpop.sfrf %1480
  %p1482 = scmp.eq.s32.totalorder %s1481, 0
  %p1483 = pneg %p1482
  %1485 = shalt.err (%p1483)
  %s1486 = scalar_lea.sflag [#allocation4], 4
  %1487 = vsyncmov %s1486
  %s1488 = vpop.sfrf %1487
  %p1489 = scmp.eq.s32.totalorder %s1488, 0
  %p1490 = pneg %p1489
  %1492 = shalt.err (%p1490)
  %s1493 = scalar_lea.sflag [#allocation4], 5
  %1494 = vsyncmov %s1493
  %s1495 = vpop.sfrf %1494
  %p1496 = scmp.eq.s32.totalorder %s1495, 0
  %p1497 = pneg %p1496
  %1499 = shalt.err (%p1497)
  %s1500 = scalar_lea.sflag [#allocation4], 6
  %1501 = vsyncmov %s1500
  %s1502 = vpop.sfrf %1501
  %p1503 = scmp.eq.s32.totalorder %s1502, 0
  %p1504 = pneg %p1503
  %1506 = shalt.err (%p1504)
  %s1507 = scalar_lea.sflag [#allocation4], 7
  %1508 = vsyncmov %s1507
  %s1509 = vpop.sfrf %1508
  %p1510 = scmp.eq.s32.totalorder %s1509, 0
  %p1511 = pneg %p1510
  %1513 = shalt.err (%p1511)

</llo_original>
